<compile_context>
chip_gen: v7x
topology: tpu7x:2x2x1
jax: 0.10.0
libtpu: 0.0.40
codegen_flags: <defaults>
</compile_context>

<pallas_src>
import functools

import numpy as np
import jax
import jax.numpy as jnp
from jax import lax
from jax.experimental import pallas as pl
from jax.experimental.pallas import tpu as pltpu


# ----------------------------- Pallas kernel ------------------------------

def _make_kernel(bias_slices):
    """Build the fused-encoder kernel with static (start, size) bias slices."""
    bias_slices = tuple((int(s), int(n)) for s, n in bias_slices)

    def kernel(x_ref, w0_ref, w1_ref, w2_ref, w3_ref, wh_ref, b_ref, out_ref):
        dot = functools.partial(jnp.dot, preferred_element_type=jnp.float32)

        def bias(i):
            start, size = bias_slices[i]
            return b_ref[:, start:start + size]          # (1, size), f32

        bf16 = jnp.bfloat16
        # conv0..conv3 as chained bf16 matmuls with f32 accumulation/ReLU.
        h = jnp.maximum(dot(x_ref[...], w0_ref[...]) + bias(0), 0.0)
        h = jnp.maximum(dot(h.astype(bf16), w1_ref[...]) + bias(1), 0.0)
        h = jnp.maximum(dot(h.astype(bf16), w2_ref[...]) + bias(2), 0.0)
        h = jnp.maximum(dot(h.astype(bf16), w3_ref[...]) + bias(3), 0.0)
        # fc0 folded into the mu/logvar head (no ReLU between them).
        out_ref[...] = (dot(h.astype(bf16), wh_ref[...]) + bias(4)
                        ).astype(out_ref.dtype)

    return kernel


def _fused_encoder(x_flat, p):
    B = x_flat.shape[0]
    widths = [p['w0'].shape[1], p['w1'].shape[1], p['w2'].shape[1],
              p['w3'].shape[1], p['wh'].shape[1]]
    offs = [0]
    for w in widths[:-1]:
        offs.append(offs[-1] + w)
    bias_slices = list(zip(offs, widths))

    vmem = pl.BlockSpec(memory_space=pltpu.MemorySpace.VMEM)
    return pl.pallas_call(
        _make_kernel(bias_slices),
        out_shape=jax.ShapeDtypeStruct((B, widths[-1]), jnp.float32),
        in_specs=[vmem] * 7,
        out_specs=vmem,
    )(x_flat, p['w0'], p['w1'], p['w2'], p['w3'], p['wh'], p['biases'])


# ---------------------- one-time parameter preparation ---------------------

def _round_up(n, m=128):
    return ((n + m - 1) // m) * m


def _pad2d(a, rows, cols):
    out = np.zeros((rows, cols), np.float32)
    out[:a.shape[0], :a.shape[1]] = a
    return out


def _conv_as_matrix(w, b, H, W, stride, pad):
    """Lower a conv (OIHW weight) to a dense matrix on NHWC-flat activations.

    out_flat[(oh*OW+ow)*Cout+co] = sum_r in_flat[r] * mat[r, ...] + b[co].
    Zero padding is folded in by dropping out-of-bounds taps.
    """
    w = np.asarray(w, np.float32)
    b = np.asarray(b, np.float32)
    Cout, Cin, KH, KW = w.shape
    OH = (H + 2 * pad - KH) // stride + 1
    OW = (W + 2 * pad - KW) // stride + 1
    mat = np.zeros((H * W * Cin, OH * OW * Cout), np.float32)
    for oh in range(OH):
        for ow in range(OW):
            col0 = (oh * OW + ow) * Cout
            for kh in range(KH):
                ih = oh * stride - pad + kh
                if not 0 <= ih < H:
                    continue
                for kw in range(KW):
                    iw = ow * stride - pad + kw
                    if not 0 <= iw < W:
                        continue
                    row0 = (ih * W + iw) * Cin
                    mat[row0:row0 + Cin, col0:col0 + Cout] = w[:, :, kh, kw].T
    bias_row = np.tile(b, OH * OW).reshape(1, -1)
    return mat, bias_row, (OH, OW)


def prepare_params(params, H=32, W=32):
    """Precompute matmul-layout bf16 weights + one fused f32 bias row (once)."""
    w0, b0, (h, w_) = _conv_as_matrix(params['conv0_w'], params['conv0_b'], H, W, 2, 1)
    w1, b1, (h, w_) = _conv_as_matrix(params['conv1_w'], params['conv1_b'], h, w_, 2, 0)
    w2, b2, (h, w_) = _conv_as_matrix(params['conv2_w'], params['conv2_b'], h, w_, 2, 0)
    w3, b3, (h, w_) = _conv_as_matrix(params['conv3_w'], params['conv3_b'], h, w_, 2, 1)
    assert h == 1 and w_ == 1, "fc0 expects a 1x1 spatial output (32x32 input)"

    # Fold fc0 into the fused (mu|logvar) head: no nonlinearity between them.
    fc0_w = np.asarray(params['fc0_w'], np.float32).T               # (nef8, nef8)
    fc0_b = np.asarray(params['fc0_b'], np.float32)                 # (nef8,)
    head_w = np.concatenate([np.asarray(params['fcmu_w'], np.float32).T,
                             np.asarray(params['fclv_w'], np.float32).T], axis=1)
    head_b = np.concatenate([np.asarray(params['fcmu_b'], np.float32),
                             np.asarray(params['fclv_b'], np.float32)])
    wh = fc0_w @ head_w                                             # (nef8, 2z)
    bh = (fc0_b @ head_w + head_b).reshape(1, -1)

    # Lane-pad every chained dim to a multiple of 128 (zero padding stays zero
    # through bias-add(0) + ReLU, so semantics are unchanged).
    d_in = H * W * 1
    d0, d1, d2, d3, dh = (w0.shape[1], w1.shape[1], w2.shape[1],
                          w3.shape[1], wh.shape[1])
    d0p, d1p, d2p, d3p, dhp = map(_round_up, (d0, d1, d2, d3, dh))

    w0p = _pad2d(w0, d_in, d0p)
    w1p = _pad2d(w1, d0p, d1p)
    w2p = _pad2d(w2, d1p, d2p)
    w3p = _pad2d(w3, d2p, d3p)
    whp = _pad2d(wh, d3p, dhp)

    biases = np.concatenate([
        _pad2d(b0, 1, d0p), _pad2d(b1, 1, d1p), _pad2d(b2, 1, d2p),
        _pad2d(b3, 1, d3p), _pad2d(bh, 1, dhp)], axis=1)            # (1, sum)

    bf = lambda a: jnp.asarray(a, jnp.bfloat16)
    return {
        'w0': bf(w0p), 'w1': bf(w1p), 'w2': bf(w2p), 'w3': bf(w3p), 'wh': bf(whp),
        'biases': jnp.asarray(biases, jnp.float32),
    }


# ------------------------------ forward pass -------------------------------

@functools.partial(jax.jit, static_argnames=('z_dim',))
def encoder_forward(prep, x_nchw, z_dim):
    B = x_nchw.shape[0]
    # Cin == 1, so NCHW-flat == NHWC-flat: plain reshape, no transpose/copy.
    x = x_nchw.reshape(B, -1).astype(jnp.bfloat16)
    out = _fused_encoder(x, prep)                 # (B, padded head dim)
    return out[:, :z_dim], out[:, z_dim:2 * z_dim]  # (mu, logvar)


# ------------------------------ reference ----------------------------------

def encoder_reference(params, x_nchw):
    def conv(x, w, b, pad):
        y = lax.conv_general_dilated(
            x, w, (2, 2), ((pad, pad), (pad, pad)),
            dimension_numbers=('NCHW', 'OIHW', 'NCHW'))
        return jax.nn.relu(y + b[None, :, None, None])
    x = conv(x_nchw, params['conv0_w'], params['conv0_b'], 1)
    x = conv(x,      params['conv1_w'], params['conv1_b'], 0)
    x = conv(x,      params['conv2_w'], params['conv2_b'], 0)
    x = conv(x,      params['conv3_w'], params['conv3_b'], 1)
    x = x.reshape(x.shape[0], -1)
    h = x @ params['fc0_w'].T + params['fc0_b']
    mu = h @ params['fcmu_w'].T + params['fcmu_b']
    lv = h @ params['fclv_w'].T + params['fclv_b']
    return mu, lv


# -------------------------------- params -----------------------------------

def init_params(key, z_dim=8, nef=2):
    keys = jax.random.split(key, 14)
    w = lambda k, shape: jax.random.normal(k, shape, jnp.float32) * 0.1
    return {
        'conv0_w': w(keys[0], (nef,     1,       4, 4)), 'conv0_b': w(keys[1],  (nef,)),
        'conv1_w': w(keys[2], (nef * 2, nef,     4, 4)), 'conv1_b': w(keys[3],  (nef * 2,)),
        'conv2_w': w(keys[4], (nef * 4, nef * 2, 4, 4)), 'conv2_b': w(keys[5],  (nef * 4,)),
        'conv3_w': w(keys[6], (nef * 8, nef * 4, 4, 4)), 'conv3_b': w(keys[7],  (nef * 8,)),
        'fc0_w':   w(keys[8],  (nef * 8, nef * 8)),      'fc0_b':   w(keys[9],  (nef * 8,)),
        'fcmu_w':  w(keys[10], (z_dim,   nef * 8)),      'fcmu_b':  w(keys[11], (z_dim,)),
        'fclv_w':  w(keys[12], (z_dim,   nef * 8)),      'fclv_b':  w(keys[13], (z_dim,)),
    }


if __name__ == "__main__":
    z_dim, nef, batch = 8, 2, 2
    key = jax.random.PRNGKey(0)
    kp, kx = jax.random.split(key)
    params = init_params(kp, z_dim=z_dim, nef=nef)
    # fc0 expects nef*8*1*1 features, which requires a 32x32 single-channel input.
    x = jax.random.normal(kx, (batch, 1, 32, 32), jnp.float32)

    prep = prepare_params(params)                       # one-time layout prep
    mu, logvar = encoder_forward(prep, x, z_dim=z_dim)  # single fused pallas_call
    jax.block_until_ready((mu, logvar))

    mu_ref, lv_ref = encoder_reference(params, x)
    assert mu.shape == (batch, z_dim) and logvar.shape == (batch, z_dim)
    # bf16 weights/activations (f32 accumulation) -> relaxed tolerance.
    assert jnp.allclose(mu, mu_ref, rtol=2e-2, atol=2e-2)
    assert jnp.allclose(logvar, lv_ref, rtol=2e-2, atol=2e-2)

    print("KERNEL_OK")
</pallas_src>

<mosaic_0001>
module attributes {stable_mosaic.version = 11 : i64} {
  func.func @kernel(%arg0: memref<2x1024xbf16, #tpu.memory_space<vmem>>, %arg1: memref<1024x512xbf16, #tpu.memory_space<vmem>>, %arg2: memref<512x256xbf16, #tpu.memory_space<vmem>>, %arg3: memref<256x128xbf16, #tpu.memory_space<vmem>>, %arg4: memref<128x128xbf16, #tpu.memory_space<vmem>>, %arg5: memref<128x128xbf16, #tpu.memory_space<vmem>>, %arg6: memref<1x1152xf32, #tpu.memory_space<vmem>>, %arg7: memref<2x128xf32, #tpu.memory_space<vmem>>) attributes {dimension_semantics = [], scalar_prefetch = 0 : i64, scratch_operands = 0 : i64, tpu.core_type = #tpu.core_type<tc>} {
    %c0 = arith.constant 0 : index
    %c0_0 = arith.constant 0 : index
    %0 = vector.load %arg0[%c0, %c0_0] : memref<2x1024xbf16, #tpu.memory_space<vmem>>, vector<2x1024xbf16>
    %c0_1 = arith.constant 0 : index
    %c0_2 = arith.constant 0 : index
    %1 = vector.load %arg1[%c0_1, %c0_2] : memref<1024x512xbf16, #tpu.memory_space<vmem>>, vector<1024x512xbf16>
    %cst = arith.constant dense<0.000000e+00> : vector<2x512xf32>
    %2 = tpu.matmul %0, %1, %cst {dimension_numbers = #tpu.dot_dimension_numbers<[1], [0], [0], [1], [0, 0, 1, 1], [], []>} : vector<2x1024xbf16>, vector<1024x512xbf16>, vector<2x512xf32> -> vector<2x512xf32>
    %c0_3 = arith.constant 0 : index
    %c0_4 = arith.constant 0 : index
    %3 = vector.load %arg6[%c0_3, %c0_4] : memref<1x1152xf32, #tpu.memory_space<vmem>>, vector<1x512xf32>
    %4 = vector.broadcast %3 : vector<1x512xf32> to vector<2x512xf32>
    %5 = arith.addf %2, %4 : vector<2x512xf32>
    %cst_5 = arith.constant 0.000000e+00 : f32
    %6 = vector.broadcast %cst_5 : f32 to vector<2x512xf32>
    %7 = arith.maximumf %5, %6 : vector<2x512xf32>
    %8 = arith.truncf %7 : vector<2x512xf32> to vector<2x512xbf16>
    %c0_6 = arith.constant 0 : index
    %c0_7 = arith.constant 0 : index
    %9 = vector.load %arg2[%c0_6, %c0_7] : memref<512x256xbf16, #tpu.memory_space<vmem>>, vector<512x256xbf16>
    %cst_8 = arith.constant dense<0.000000e+00> : vector<2x256xf32>
    %10 = tpu.matmul %8, %9, %cst_8 {dimension_numbers = #tpu.dot_dimension_numbers<[1], [0], [0], [1], [0, 0, 1, 1], [], []>} : vector<2x512xbf16>, vector<512x256xbf16>, vector<2x256xf32> -> vector<2x256xf32>
    %c0_9 = arith.constant 0 : index
    %c512 = arith.constant 512 : index
    %11 = vector.load %arg6[%c0_9, %c512] : memref<1x1152xf32, #tpu.memory_space<vmem>>, vector<1x256xf32>
    %12 = vector.broadcast %11 : vector<1x256xf32> to vector<2x256xf32>
    %13 = arith.addf %10, %12 : vector<2x256xf32>
    %cst_10 = arith.constant 0.000000e+00 : f32
    %14 = vector.broadcast %cst_10 : f32 to vector<2x256xf32>
    %15 = arith.maximumf %13, %14 : vector<2x256xf32>
    %16 = arith.truncf %15 : vector<2x256xf32> to vector<2x256xbf16>
    %c0_11 = arith.constant 0 : index
    %c0_12 = arith.constant 0 : index
    %17 = vector.load %arg3[%c0_11, %c0_12] : memref<256x128xbf16, #tpu.memory_space<vmem>>, vector<256x128xbf16>
    %cst_13 = arith.constant dense<0.000000e+00> : vector<2x128xf32>
    %18 = tpu.matmul %16, %17, %cst_13 {dimension_numbers = #tpu.dot_dimension_numbers<[1], [0], [0], [1], [0, 0, 1, 1], [], []>} : vector<2x256xbf16>, vector<256x128xbf16>, vector<2x128xf32> -> vector<2x128xf32>
    %c0_14 = arith.constant 0 : index
    %c768 = arith.constant 768 : index
    %19 = vector.load %arg6[%c0_14, %c768] : memref<1x1152xf32, #tpu.memory_space<vmem>>, vector<1x128xf32>
    %20 = vector.broadcast %19 : vector<1x128xf32> to vector<2x128xf32>
    %21 = arith.addf %18, %20 : vector<2x128xf32>
    %cst_15 = arith.constant 0.000000e+00 : f32
    %22 = vector.broadcast %cst_15 : f32 to vector<2x128xf32>
    %23 = arith.maximumf %21, %22 : vector<2x128xf32>
    %24 = arith.truncf %23 : vector<2x128xf32> to vector<2x128xbf16>
    %c0_16 = arith.constant 0 : index
    %c0_17 = arith.constant 0 : index
    %25 = vector.load %arg4[%c0_16, %c0_17] : memref<128x128xbf16, #tpu.memory_space<vmem>>, vector<128x128xbf16>
    %cst_18 = arith.constant dense<0.000000e+00> : vector<2x128xf32>
    %26 = tpu.matmul %24, %25, %cst_18 {dimension_numbers = #tpu.dot_dimension_numbers<[1], [0], [0], [1], [0, 0, 1, 1], [], []>} : vector<2x128xbf16>, vector<128x128xbf16>, vector<2x128xf32> -> vector<2x128xf32>
    %c0_19 = arith.constant 0 : index
    %c896 = arith.constant 896 : index
    %27 = vector.load %arg6[%c0_19, %c896] : memref<1x1152xf32, #tpu.memory_space<vmem>>, vector<1x128xf32>
    %28 = vector.broadcast %27 : vector<1x128xf32> to vector<2x128xf32>
    %29 = arith.addf %26, %28 : vector<2x128xf32>
    %cst_20 = arith.constant 0.000000e+00 : f32
    %30 = vector.broadcast %cst_20 : f32 to vector<2x128xf32>
    %31 = arith.maximumf %29, %30 : vector<2x128xf32>
    %32 = arith.truncf %31 : vector<2x128xf32> to vector<2x128xbf16>
    %c0_21 = arith.constant 0 : index
    %c0_22 = arith.constant 0 : index
    %33 = vector.load %arg5[%c0_21, %c0_22] : memref<128x128xbf16, #tpu.memory_space<vmem>>, vector<128x128xbf16>
    %cst_23 = arith.constant dense<0.000000e+00> : vector<2x128xf32>
    %34 = tpu.matmul %32, %33, %cst_23 {dimension_numbers = #tpu.dot_dimension_numbers<[1], [0], [0], [1], [0, 0, 1, 1], [], []>} : vector<2x128xbf16>, vector<128x128xbf16>, vector<2x128xf32> -> vector<2x128xf32>
    %c0_24 = arith.constant 0 : index
    %c1024 = arith.constant 1024 : index
    %35 = vector.load %arg6[%c0_24, %c1024] : memref<1x1152xf32, #tpu.memory_space<vmem>>, vector<1x128xf32>
    %36 = vector.broadcast %35 : vector<1x128xf32> to vector<2x128xf32>
    %37 = arith.addf %34, %36 : vector<2x128xf32>
    %c0_25 = arith.constant 0 : index
    %c0_26 = arith.constant 0 : index
    %38 = vector.load %arg7[%c0_25, %c0_26] : memref<2x128xf32, #tpu.memory_space<vmem>>, vector<2x128xf32>
    tpu.vector_store %arg7[%c0_25, %c0_26], %37 {strides = array<i32>} : memref<2x128xf32, #tpu.memory_space<vmem>>, vector<2x128xf32>,
    return
  }
}

</mosaic_0001>

<llo_original>
// kernel: encoder_forward.1
$region0: #{encoder_forward.1}
  #allocation0 [shape = 'u32[]', space=smem, size = 0x4, offset = 0x4, fixed_abs, tag = 'smem constant byte address 0x4 - core index']
  #allocation1 [shape = 'u32[144,128]{1,0:T(1,128)}', space=vmem, size = 0x12000, scoped, tag = 'internal scratch']
  %s0 = inlined_call_operand.vmem [shape: bf16[2,1024], index: 0, kind: input, shape index: {}]
  %s1 = inlined_call_operand.hbm [shape: bf16[1024,512], index: 1, kind: input, shape index: {}]
  %s2 = inlined_call_operand.hbm [shape: bf16[512,256], index: 2, kind: input, shape index: {}]
  %s3 = inlined_call_operand.vmem [shape: bf16[256,128], index: 3, kind: input, shape index: {}]
  %s4 = inlined_call_operand.hbm [shape: bf16[128,128], index: 4, kind: input, shape index: {}]
  %s5 = inlined_call_operand.hbm [shape: bf16[128,128], index: 5, kind: input, shape index: {}]
  %s6 = inlined_call_operand.vmem [shape: f32[1,1152], index: 6, kind: input, shape index: {}]
  %s7 = inlined_call_operand.vmem [shape: f32[2,128], index: 7, kind: output, shape index: {}]
  %s8 = sld [smem:[#allocation0]]
  $region54: #{encoder_forward.1} parent=0
    _
  %s10 = ssub.s32 1, %s8
  %s11 = scalar_select 0, %s10, %s8
  $region1: #{encoder_forward.1} parent=0
    #allocation2 [shape = 'u8[1048576]{0}', space=vmem, size = 0x100000, scoped, tag = 'input window, operand 1, single buffered']
    #allocation3 [shape = 's32[1]{0}', space=sflag, size = 0x4, scoped, tag = 'scoped memory for encoder_forward.1']
    #allocation4 [shape = 'u8[262144]{0}', space=vmem, size = 0x40000, scoped, tag = 'input window, operand 2, single buffered']
    #allocation5 [shape = 's32[1]{0}', space=sflag, size = 0x4, scoped, tag = 'scoped memory for encoder_forward.1']
    #allocation6 [shape = 'u8[32768]{0}', space=vmem, size = 0x8000, scoped, tag = 'input window, operand 4, single buffered']
    #allocation7 [shape = 'u8[32768]{0}', space=vmem, size = 0x8000, scoped, tag = 'input window, operand 5, single buffered']
    #allocation8 [shape = 's32[1]{0}', space=sflag, size = 0x4, scoped, tag = 'scoped memory for encoder_forward.1']
    %12 = vsyncpa [#allocation3], 0
    %13 = vsyncpa [#allocation5], 0
    %14 = vsyncpa [#allocation8], 0
    // Predicated region
    $region2: #{encoder_forward.1} parent=1 // pred_check
      _
    $region3: #{encoder_forward.1} parent=1 // pred_check_branch
      %16 = sbr.rel (0) target = $region5
    $region4: #{encoder_forward.1} parent=1 // pred_region
      _
    $region5: #{encoder_forward.1} parent=1 // pred_fallthru
      _
    // Predicated region
    $region6: #{encoder_forward.1} parent=1 // pred_check
      _
    $region7: #{encoder_forward.1} parent=1 // pred_check_branch
      %18 = sbr.rel (0) target = $region9
    $region8: #{encoder_forward.1} parent=1 // pred_region
      %s20 = ssub.s32 32768, 32768
      %21 = vsyncadd [#allocation3], %s20
      %s22 = sshll.u32 [#allocation2], 4
      %s23 = int_to_ptr.vmem [resolvable:$true] %s22
      %28 = dma.hbm_to_vmem [thread:$0]  %s1, 32768, %s23, [#allocation3], 256, 256, 16
    $region9: #{encoder_forward.1} parent=1 // pred_fallthru
      _
    // Predicated region
    $region10: #{encoder_forward.1} parent=1 // pred_check
      _
    $region11: #{encoder_forward.1} parent=1 // pred_check_branch
      %30 = sbr.rel (0) target = $region13
    $region12: #{encoder_forward.1} parent=1 // pred_region
      %s32 = ssub.s32 8192, 8192
      %33 = vsyncadd [#allocation5], %s32
      %s34 = sshll.u32 [#allocation4], 4
      %s35 = int_to_ptr.vmem [resolvable:$true] %s34
      %40 = dma.hbm_to_vmem [thread:$0]  %s2, 8192, %s35, [#allocation5], 128, 128, 8
    $region13: #{encoder_forward.1} parent=1 // pred_fallthru
      _
    // Predicated region
    $region14: #{encoder_forward.1} parent=1 // pred_check
      _
    $region15: #{encoder_forward.1} parent=1 // pred_check_branch
      %42 = sbr.rel (0) target = $region17
    $region16: #{encoder_forward.1} parent=1 // pred_region
      _
    $region17: #{encoder_forward.1} parent=1 // pred_fallthru
      _
    // Predicated region
    $region18: #{encoder_forward.1} parent=1 // pred_check
      _
    $region19: #{encoder_forward.1} parent=1 // pred_check_branch
      %44 = sbr.rel (0) target = $region21
    $region20: #{encoder_forward.1} parent=1 // pred_region
      %s46 = ssub.s32 1024, 1024
      %47 = vsyncadd [#allocation5], %s46
      %s48 = sshll.u32 [#allocation6], 4
      %s49 = int_to_ptr.vmem [resolvable:$true] %s48
      %54 = dma.hbm_to_vmem [thread:$0]  %s4, 1024, %s49, [#allocation5], 64, 64, 4
    $region21: #{encoder_forward.1} parent=1 // pred_fallthru
      _
    // Predicated region
    $region22: #{encoder_forward.1} parent=1 // pred_check
      _
    $region23: #{encoder_forward.1} parent=1 // pred_check_branch
      %56 = sbr.rel (0) target = $region25
    $region24: #{encoder_forward.1} parent=1 // pred_region
      %s58 = ssub.s32 1024, 1024
      %59 = vsyncadd [#allocation8], %s58
      %s60 = sshll.u32 [#allocation7], 4
      %s61 = int_to_ptr.vmem [resolvable:$true] %s60
      %66 = dma.hbm_to_vmem [thread:$0]  %s5, 1024, %s61, [#allocation8], 64, 64, 4
    $region25: #{encoder_forward.1} parent=1 // pred_fallthru
      _
    // Predicated region
    $region26: #{encoder_forward.1} parent=1 // pred_check
      _
    $region27: #{encoder_forward.1} parent=1 // pred_check_branch
      %68 = sbr.rel (0) target = $region29
    $region28: #{encoder_forward.1} parent=1 // pred_region
      _
    $region29: #{encoder_forward.1} parent=1 // pred_fallthru
      _
    // Predicated region
    $region30: #{encoder_forward.1} parent=1 // pred_check
      _
    $region31: #{encoder_forward.1} parent=1 // pred_check_branch
      %70 = sbr.rel (0) target = $region33
    $region32: #{encoder_forward.1} parent=1 // pred_region
      %71 = dma.done [#allocation3], 32768
    $region33: #{encoder_forward.1} parent=1 // pred_fallthru
      _
    // Predicated region
    $region34: #{encoder_forward.1} parent=1 // pred_check
      _
    $region35: #{encoder_forward.1} parent=1 // pred_check_branch
      %73 = sbr.rel (0) target = $region37
    $region36: #{encoder_forward.1} parent=1 // pred_region
      %74 = dma.done [#allocation5], 8192
    $region37: #{encoder_forward.1} parent=1 // pred_fallthru
      _
    // Predicated region
    $region38: #{encoder_forward.1} parent=1 // pred_check
      _
    $region39: #{encoder_forward.1} parent=1 // pred_check_branch
      %76 = sbr.rel (0) target = $region41
    $region40: #{encoder_forward.1} parent=1 // pred_region
      %77 = dma.done [#allocation5], 1024
    $region41: #{encoder_forward.1} parent=1 // pred_fallthru
      _
    // Predicated region
    $region42: #{encoder_forward.1} parent=1 // pred_check
      _
    $region43: #{encoder_forward.1} parent=1 // pred_check_branch
      %79 = sbr.rel (0) target = $region45
    $region44: #{encoder_forward.1} parent=1 // pred_region
      %80 = dma.done [#allocation8], 1024
    $region45: #{encoder_forward.1} parent=1 // pred_fallthru
      _
    %v82 = vld [vmem:[%s0] sm:$0xff]
    %v83 = vld [vmem:[#allocation2] sm:$0xff]
    %v84 = vld [vmem:[#allocation2 + $0x8] sm:$0xff]
    %v85 = vld [vmem:[#allocation2 + $0x10] sm:$0xff]
    %v86 = vld [vmem:[#allocation2 + $0x18] sm:$0xff]
    %v87 = vld [vmem:[#allocation2 + $0x20] sm:$0xff]
    %v88 = vld [vmem:[#allocation2 + $0x28] sm:$0xff]
    %v89 = vld [vmem:[#allocation2 + $0x30] sm:$0xff]
    %v90 = vld [vmem:[#allocation2 + $0x38] sm:$0xff]
    %v91 = vld [vmem:[#allocation2 + $0x40] sm:$0xff]
    %v92 = vld [vmem:[#allocation2 + $0x48] sm:$0xff]
    %v93 = vld [vmem:[#allocation2 + $0x50] sm:$0xff]
    %v94 = vld [vmem:[#allocation2 + $0x58] sm:$0xff]
    %v95 = vld [vmem:[#allocation2 + $0x60] sm:$0xff]
    %v96 = vld [vmem:[#allocation2 + $0x68] sm:$0xff]
    %v97 = vld [vmem:[#allocation2 + $0x70] sm:$0xff]
    %v98 = vld [vmem:[#allocation2 + $0x78] sm:$0xff]
    %v99 = vld [vmem:[#allocation2 + $0x80] sm:$0xff]
    %v100 = vld [vmem:[#allocation2 + $0x88] sm:$0xff]
    %v101 = vld [vmem:[#allocation2 + $0x90] sm:$0xff]
    %v102 = vld [vmem:[#allocation2 + $0x98] sm:$0xff]
    %v103 = vld [vmem:[#allocation2 + $0xa0] sm:$0xff]
    %v104 = vld [vmem:[#allocation2 + $0xa8] sm:$0xff]
    %v105 = vld [vmem:[#allocation2 + $0xb0] sm:$0xff]
    %v106 = vld [vmem:[#allocation2 + $0xb8] sm:$0xff]
    %v107 = vld [vmem:[#allocation2 + $0xc0] sm:$0xff]
    %v108 = vld [vmem:[#allocation2 + $0xc8] sm:$0xff]
    %v109 = vld [vmem:[#allocation2 + $0xd0] sm:$0xff]
    %v110 = vld [vmem:[#allocation2 + $0xd8] sm:$0xff]
    %v111 = vld [vmem:[#allocation2 + $0xe0] sm:$0xff]
    %v112 = vld [vmem:[#allocation2 + $0xe8] sm:$0xff]
    %v113 = vld [vmem:[#allocation2 + $0xf0] sm:$0xff]
    %v114 = vld [vmem:[#allocation2 + $0xf8] sm:$0xff]
    %v115 = vld [vmem:[#allocation2 + $0x100] sm:$0xff]
    %v116 = vld [vmem:[#allocation2 + $0x108] sm:$0xff]
    %v117 = vld [vmem:[#allocation2 + $0x110] sm:$0xff]
    %v118 = vld [vmem:[#allocation2 + $0x118] sm:$0xff]
    %v119 = vld [vmem:[#allocation2 + $0x120] sm:$0xff]
    %v120 = vld [vmem:[#allocation2 + $0x128] sm:$0xff]
    %v121 = vld [vmem:[#allocation2 + $0x130] sm:$0xff]
    %v122 = vld [vmem:[#allocation2 + $0x138] sm:$0xff]
    %v123 = vld [vmem:[#allocation2 + $0x140] sm:$0xff]
    %v124 = vld [vmem:[#allocation2 + $0x148] sm:$0xff]
    %v125 = vld [vmem:[#allocation2 + $0x150] sm:$0xff]
    %v126 = vld [vmem:[#allocation2 + $0x158] sm:$0xff]
    %v127 = vld [vmem:[#allocation2 + $0x160] sm:$0xff]
    %v128 = vld [vmem:[#allocation2 + $0x168] sm:$0xff]
    %v129 = vld [vmem:[#allocation2 + $0x170] sm:$0xff]
    %v130 = vld [vmem:[#allocation2 + $0x178] sm:$0xff]
    %v131 = vld [vmem:[#allocation2 + $0x180] sm:$0xff]
    %v132 = vld [vmem:[#allocation2 + $0x188] sm:$0xff]
    %v133 = vld [vmem:[#allocation2 + $0x190] sm:$0xff]
    %v134 = vld [vmem:[#allocation2 + $0x198] sm:$0xff]
    %v135 = vld [vmem:[#allocation2 + $0x1a0] sm:$0xff]
    %v136 = vld [vmem:[#allocation2 + $0x1a8] sm:$0xff]
    %v137 = vld [vmem:[#allocation2 + $0x1b0] sm:$0xff]
    %v138 = vld [vmem:[#allocation2 + $0x1b8] sm:$0xff]
    %v139 = vld [vmem:[#allocation2 + $0x1c0] sm:$0xff]
    %v140 = vld [vmem:[#allocation2 + $0x1c8] sm:$0xff]
    %v141 = vld [vmem:[#allocation2 + $0x1d0] sm:$0xff]
    %v142 = vld [vmem:[#allocation2 + $0x1d8] sm:$0xff]
    %v143 = vld [vmem:[#allocation2 + $0x1e0] sm:$0xff]
    %v144 = vld [vmem:[#allocation2 + $0x1e8] sm:$0xff]
    %v145 = vld [vmem:[#allocation2 + $0x1f0] sm:$0xff]
    %v146 = vld [vmem:[#allocation2 + $0x1f8] sm:$0xff]
    %v147 = vld [vmem:[#allocation2 + $0x200] sm:$0xff]
    %v148 = vld [vmem:[#allocation2 + $0x208] sm:$0xff]
    %v149 = vld [vmem:[#allocation2 + $0x210] sm:$0xff]
    %v150 = vld [vmem:[#allocation2 + $0x218] sm:$0xff]
    %v151 = vld [vmem:[#allocation2 + $0x220] sm:$0xff]
    %v152 = vld [vmem:[#allocation2 + $0x228] sm:$0xff]
    %v153 = vld [vmem:[#allocation2 + $0x230] sm:$0xff]
    %v154 = vld [vmem:[#allocation2 + $0x238] sm:$0xff]
    %v155 = vld [vmem:[#allocation2 + $0x240] sm:$0xff]
    %v156 = vld [vmem:[#allocation2 + $0x248] sm:$0xff]
    %v157 = vld [vmem:[#allocation2 + $0x250] sm:$0xff]
    %v158 = vld [vmem:[#allocation2 + $0x258] sm:$0xff]
    %v159 = vld [vmem:[#allocation2 + $0x260] sm:$0xff]
    %v160 = vld [vmem:[#allocation2 + $0x268] sm:$0xff]
    %v161 = vld [vmem:[#allocation2 + $0x270] sm:$0xff]
    %v162 = vld [vmem:[#allocation2 + $0x278] sm:$0xff]
    %v163 = vld [vmem:[#allocation2 + $0x280] sm:$0xff]
    %v164 = vld [vmem:[#allocation2 + $0x288] sm:$0xff]
    %v165 = vld [vmem:[#allocation2 + $0x290] sm:$0xff]
    %v166 = vld [vmem:[#allocation2 + $0x298] sm:$0xff]
    %v167 = vld [vmem:[#allocation2 + $0x2a0] sm:$0xff]
    %v168 = vld [vmem:[#allocation2 + $0x2a8] sm:$0xff]
    %v169 = vld [vmem:[#allocation2 + $0x2b0] sm:$0xff]
    %v170 = vld [vmem:[#allocation2 + $0x2b8] sm:$0xff]
    %v171 = vld [vmem:[#allocation2 + $0x2c0] sm:$0xff]
    %v172 = vld [vmem:[#allocation2 + $0x2c8] sm:$0xff]
    %v173 = vld [vmem:[#allocation2 + $0x2d0] sm:$0xff]
    %v174 = vld [vmem:[#allocation2 + $0x2d8] sm:$0xff]
    %v175 = vld [vmem:[#allocation2 + $0x2e0] sm:$0xff]
    %v176 = vld [vmem:[#allocation2 + $0x2e8] sm:$0xff]
    %v177 = vld [vmem:[#allocation2 + $0x2f0] sm:$0xff]
    %v178 = vld [vmem:[#allocation2 + $0x2f8] sm:$0xff]
    %v179 = vld [vmem:[#allocation2 + $0x300] sm:$0xff]
    %v180 = vld [vmem:[#allocation2 + $0x308] sm:$0xff]
    %v181 = vld [vmem:[#allocation2 + $0x310] sm:$0xff]
    %v182 = vld [vmem:[#allocation2 + $0x318] sm:$0xff]
    %v183 = vld [vmem:[#allocation2 + $0x320] sm:$0xff]
    %v184 = vld [vmem:[#allocation2 + $0x328] sm:$0xff]
    %v185 = vld [vmem:[#allocation2 + $0x330] sm:$0xff]
    %v186 = vld [vmem:[#allocation2 + $0x338] sm:$0xff]
    %v187 = vld [vmem:[#allocation2 + $0x340] sm:$0xff]
    %v188 = vld [vmem:[#allocation2 + $0x348] sm:$0xff]
    %v189 = vld [vmem:[#allocation2 + $0x350] sm:$0xff]
    %v190 = vld [vmem:[#allocation2 + $0x358] sm:$0xff]
    %v191 = vld [vmem:[#allocation2 + $0x360] sm:$0xff]
    %v192 = vld [vmem:[#allocation2 + $0x368] sm:$0xff]
    %v193 = vld [vmem:[#allocation2 + $0x370] sm:$0xff]
    %v194 = vld [vmem:[#allocation2 + $0x378] sm:$0xff]
    %v195 = vld [vmem:[#allocation2 + $0x380] sm:$0xff]
    %v196 = vld [vmem:[#allocation2 + $0x388] sm:$0xff]
    %v197 = vld [vmem:[#allocation2 + $0x390] sm:$0xff]
    %v198 = vld [vmem:[#allocation2 + $0x398] sm:$0xff]
    %v199 = vld [vmem:[#allocation2 + $0x3a0] sm:$0xff]
    %v200 = vld [vmem:[#allocation2 + $0x3a8] sm:$0xff]
    %v201 = vld [vmem:[#allocation2 + $0x3b0] sm:$0xff]
    %v202 = vld [vmem:[#allocation2 + $0x3b8] sm:$0xff]
    %v203 = vld [vmem:[#allocation2 + $0x3c0] sm:$0xff]
    %v204 = vld [vmem:[#allocation2 + $0x3c8] sm:$0xff]
    %v205 = vld [vmem:[#allocation2 + $0x3d0] sm:$0xff]
    %v206 = vld [vmem:[#allocation2 + $0x3d8] sm:$0xff]
    %v207 = vld [vmem:[#allocation2 + $0x3e0] sm:$0xff]
    %v208 = vld [vmem:[#allocation2 + $0x3e8] sm:$0xff]
    %v209 = vld [vmem:[#allocation2 + $0x3f0] sm:$0xff]
    %v210 = vld [vmem:[#allocation2 + $0x3f8] sm:$0xff]
    %v211 = vld [vmem:[#allocation2 + $0x400] sm:$0xff]
    %v212 = vld [vmem:[#allocation2 + $0x408] sm:$0xff]
    %v213 = vld [vmem:[#allocation2 + $0x410] sm:$0xff]
    %v214 = vld [vmem:[#allocation2 + $0x418] sm:$0xff]
    %v215 = vld [vmem:[#allocation2 + $0x420] sm:$0xff]
    %v216 = vld [vmem:[#allocation2 + $0x428] sm:$0xff]
    %v217 = vld [vmem:[#allocation2 + $0x430] sm:$0xff]
    %v218 = vld [vmem:[#allocation2 + $0x438] sm:$0xff]
    %v219 = vld [vmem:[#allocation2 + $0x440] sm:$0xff]
    %v220 = vld [vmem:[#allocation2 + $0x448] sm:$0xff]
    %v221 = vld [vmem:[#allocation2 + $0x450] sm:$0xff]
    %v222 = vld [vmem:[#allocation2 + $0x458] sm:$0xff]
    %v223 = vld [vmem:[#allocation2 + $0x460] sm:$0xff]
    %v224 = vld [vmem:[#allocation2 + $0x468] sm:$0xff]
    %v225 = vld [vmem:[#allocation2 + $0x470] sm:$0xff]
    %v226 = vld [vmem:[#allocation2 + $0x478] sm:$0xff]
    %v227 = vld [vmem:[#allocation2 + $0x480] sm:$0xff]
    %v228 = vld [vmem:[#allocation2 + $0x488] sm:$0xff]
    %v229 = vld [vmem:[#allocation2 + $0x490] sm:$0xff]
    %v230 = vld [vmem:[#allocation2 + $0x498] sm:$0xff]
    %v231 = vld [vmem:[#allocation2 + $0x4a0] sm:$0xff]
    %v232 = vld [vmem:[#allocation2 + $0x4a8] sm:$0xff]
    %v233 = vld [vmem:[#allocation2 + $0x4b0] sm:$0xff]
    %v234 = vld [vmem:[#allocation2 + $0x4b8] sm:$0xff]
    %v235 = vld [vmem:[#allocation2 + $0x4c0] sm:$0xff]
    %v236 = vld [vmem:[#allocation2 + $0x4c8] sm:$0xff]
    %v237 = vld [vmem:[#allocation2 + $0x4d0] sm:$0xff]
    %v238 = vld [vmem:[#allocation2 + $0x4d8] sm:$0xff]
    %v239 = vld [vmem:[#allocation2 + $0x4e0] sm:$0xff]
    %v240 = vld [vmem:[#allocation2 + $0x4e8] sm:$0xff]
    %v241 = vld [vmem:[#allocation2 + $0x4f0] sm:$0xff]
    %v242 = vld [vmem:[#allocation2 + $0x4f8] sm:$0xff]
    %v243 = vld [vmem:[#allocation2 + $0x500] sm:$0xff]
    %v244 = vld [vmem:[#allocation2 + $0x508] sm:$0xff]
    %v245 = vld [vmem:[#allocation2 + $0x510] sm:$0xff]
    %v246 = vld [vmem:[#allocation2 + $0x518] sm:$0xff]
    %v247 = vld [vmem:[#allocation2 + $0x520] sm:$0xff]
    %v248 = vld [vmem:[#allocation2 + $0x528] sm:$0xff]
    %v249 = vld [vmem:[#allocation2 + $0x530] sm:$0xff]
    %v250 = vld [vmem:[#allocation2 + $0x538] sm:$0xff]
    %v251 = vld [vmem:[#allocation2 + $0x540] sm:$0xff]
    %v252 = vld [vmem:[#allocation2 + $0x548] sm:$0xff]
    %v253 = vld [vmem:[#allocation2 + $0x550] sm:$0xff]
    %v254 = vld [vmem:[#allocation2 + $0x558] sm:$0xff]
    %v255 = vld [vmem:[#allocation2 + $0x560] sm:$0xff]
    %v256 = vld [vmem:[#allocation2 + $0x568] sm:$0xff]
    %v257 = vld [vmem:[#allocation2 + $0x570] sm:$0xff]
    %v258 = vld [vmem:[#allocation2 + $0x578] sm:$0xff]
    %v259 = vld [vmem:[#allocation2 + $0x580] sm:$0xff]
    %v260 = vld [vmem:[#allocation2 + $0x588] sm:$0xff]
    %v261 = vld [vmem:[#allocation2 + $0x590] sm:$0xff]
    %v262 = vld [vmem:[#allocation2 + $0x598] sm:$0xff]
    %v263 = vld [vmem:[#allocation2 + $0x5a0] sm:$0xff]
    %v264 = vld [vmem:[#allocation2 + $0x5a8] sm:$0xff]
    %v265 = vld [vmem:[#allocation2 + $0x5b0] sm:$0xff]
    %v266 = vld [vmem:[#allocation2 + $0x5b8] sm:$0xff]
    %v267 = vld [vmem:[#allocation2 + $0x5c0] sm:$0xff]
    %v268 = vld [vmem:[#allocation2 + $0x5c8] sm:$0xff]
    %v269 = vld [vmem:[#allocation2 + $0x5d0] sm:$0xff]
    %v270 = vld [vmem:[#allocation2 + $0x5d8] sm:$0xff]
    %v271 = vld [vmem:[#allocation2 + $0x5e0] sm:$0xff]
    %v272 = vld [vmem:[#allocation2 + $0x5e8] sm:$0xff]
    %v273 = vld [vmem:[#allocation2 + $0x5f0] sm:$0xff]
    %v274 = vld [vmem:[#allocation2 + $0x5f8] sm:$0xff]
    %v275 = vld [vmem:[#allocation2 + $0x600] sm:$0xff]
    %v276 = vld [vmem:[#allocation2 + $0x608] sm:$0xff]
    %v277 = vld [vmem:[#allocation2 + $0x610] sm:$0xff]
    %v278 = vld [vmem:[#allocation2 + $0x618] sm:$0xff]
    %v279 = vld [vmem:[#allocation2 + $0x620] sm:$0xff]
    %v280 = vld [vmem:[#allocation2 + $0x628] sm:$0xff]
    %v281 = vld [vmem:[#allocation2 + $0x630] sm:$0xff]
    %v282 = vld [vmem:[#allocation2 + $0x638] sm:$0xff]
    %v283 = vld [vmem:[#allocation2 + $0x640] sm:$0xff]
    %v284 = vld [vmem:[#allocation2 + $0x648] sm:$0xff]
    %v285 = vld [vmem:[#allocation2 + $0x650] sm:$0xff]
    %v286 = vld [vmem:[#allocation2 + $0x658] sm:$0xff]
    %v287 = vld [vmem:[#allocation2 + $0x660] sm:$0xff]
    %v288 = vld [vmem:[#allocation2 + $0x668] sm:$0xff]
    %v289 = vld [vmem:[#allocation2 + $0x670] sm:$0xff]
    %v290 = vld [vmem:[#allocation2 + $0x678] sm:$0xff]
    %v291 = vld [vmem:[#allocation2 + $0x680] sm:$0xff]
    %v292 = vld [vmem:[#allocation2 + $0x688] sm:$0xff]
    %v293 = vld [vmem:[#allocation2 + $0x690] sm:$0xff]
    %v294 = vld [vmem:[#allocation2 + $0x698] sm:$0xff]
    %v295 = vld [vmem:[#allocation2 + $0x6a0] sm:$0xff]
    %v296 = vld [vmem:[#allocation2 + $0x6a8] sm:$0xff]
    %v297 = vld [vmem:[#allocation2 + $0x6b0] sm:$0xff]
    %v298 = vld [vmem:[#allocation2 + $0x6b8] sm:$0xff]
    %v299 = vld [vmem:[#allocation2 + $0x6c0] sm:$0xff]
    %v300 = vld [vmem:[#allocation2 + $0x6c8] sm:$0xff]
    %v301 = vld [vmem:[#allocation2 + $0x6d0] sm:$0xff]
    %v302 = vld [vmem:[#allocation2 + $0x6d8] sm:$0xff]
    %v303 = vld [vmem:[#allocation2 + $0x6e0] sm:$0xff]
    %v304 = vld [vmem:[#allocation2 + $0x6e8] sm:$0xff]
    %v305 = vld [vmem:[#allocation2 + $0x6f0] sm:$0xff]
    %v306 = vld [vmem:[#allocation2 + $0x6f8] sm:$0xff]
    %v307 = vld [vmem:[#allocation2 + $0x700] sm:$0xff]
    %v308 = vld [vmem:[#allocation2 + $0x708] sm:$0xff]
    %v309 = vld [vmem:[#allocation2 + $0x710] sm:$0xff]
    %v310 = vld [vmem:[#allocation2 + $0x718] sm:$0xff]
    %v311 = vld [vmem:[#allocation2 + $0x720] sm:$0xff]
    %v312 = vld [vmem:[#allocation2 + $0x728] sm:$0xff]
    %v313 = vld [vmem:[#allocation2 + $0x730] sm:$0xff]
    %v314 = vld [vmem:[#allocation2 + $0x738] sm:$0xff]
    %v315 = vld [vmem:[#allocation2 + $0x740] sm:$0xff]
    %v316 = vld [vmem:[#allocation2 + $0x748] sm:$0xff]
    %v317 = vld [vmem:[#allocation2 + $0x750] sm:$0xff]
    %v318 = vld [vmem:[#allocation2 + $0x758] sm:$0xff]
    %v319 = vld [vmem:[#allocation2 + $0x760] sm:$0xff]
    %v320 = vld [vmem:[#allocation2 + $0x768] sm:$0xff]
    %v321 = vld [vmem:[#allocation2 + $0x770] sm:$0xff]
    %v322 = vld [vmem:[#allocation2 + $0x778] sm:$0xff]
    %v323 = vld [vmem:[#allocation2 + $0x780] sm:$0xff]
    %v324 = vld [vmem:[#allocation2 + $0x788] sm:$0xff]
    %v325 = vld [vmem:[#allocation2 + $0x790] sm:$0xff]
    %v326 = vld [vmem:[#allocation2 + $0x798] sm:$0xff]
    %v327 = vld [vmem:[#allocation2 + $0x7a0] sm:$0xff]
    %v328 = vld [vmem:[#allocation2 + $0x7a8] sm:$0xff]
    %v329 = vld [vmem:[#allocation2 + $0x7b0] sm:$0xff]
    %v330 = vld [vmem:[#allocation2 + $0x7b8] sm:$0xff]
    %v331 = vld [vmem:[#allocation2 + $0x7c0] sm:$0xff]
    %v332 = vld [vmem:[#allocation2 + $0x7c8] sm:$0xff]
    %v333 = vld [vmem:[#allocation2 + $0x7d0] sm:$0xff]
    %v334 = vld [vmem:[#allocation2 + $0x7d8] sm:$0xff]
    %v335 = vld [vmem:[#allocation2 + $0x7e0] sm:$0xff]
    %v336 = vld [vmem:[#allocation2 + $0x7e8] sm:$0xff]
    %v337 = vld [vmem:[#allocation2 + $0x7f0] sm:$0xff]
    %v338 = vld [vmem:[#allocation2 + $0x7f8] sm:$0xff]
    %v339 = vld [vmem:[%s6] sm:$0xf]
    %v341 = vlaneseq
    %v342 = vshrl.u32 %v341, 7
    %v343 = vsub.s32 0, %v342
    %v344 = vrot.slane %v339, %v343
    %v345 = vlaneseq
    %v346 = vshrl.u32 %v345, 7
    %v347 = vsub.s32 1, %v346
    %v348 = vrot.slane %v339, %v347
    %v349 = vlaneseq
    %v350 = vshrl.u32 %v349, 7
    %v351 = vsub.s32 2, %v350
    %v352 = vrot.slane %v339, %v351
    %v353 = vlaneseq
    %v354 = vshrl.u32 %v353, 7
    %v355 = vsub.s32 3, %v354
    %v356 = vrot.slane %v339, %v355
    %v362 = vcombine.high %v82, %v82
    %v364 = vunpack.c.l.s4 1966171168
    %v365 = vunpack.c.0.s8 %v364
    %v366 = vlaneseq
    %v367 = vshrl.u32 %v366, 7
    %v368 = vsub.s32 %v365, %v367
    %v369 = vrot.slane %v82, %v368
    %v371 = vunpack.c.l.s4 1966171168
    %v372 = vunpack.c.0.s8 %v371
    %v373 = vlaneseq
    %v374 = vshrl.u32 %v373, 7
    %v375 = vsub.s32 %v372, %v374
    %v376 = vrot.slane %v362, %v375
    %v377 = vcombine.high %v369, %v369
    %v378 = vcombine.high %v376, %v376
    %v380 = vunpack.c.l.s4 1966171168
    %v381 = vunpack.c.0.s8 %v380
    %v382 = vlaneseq
    %v383 = vshrl.u32 %v382, 7
    %v384 = vsub.s32 %v381, %v383
    %v385 = vrot.slane %v369, %v384
    %v387 = vunpack.c.l.s4 1966171168
    %v388 = vunpack.c.0.s8 %v387
    %v389 = vlaneseq
    %v390 = vshrl.u32 %v389, 7
    %v391 = vsub.s32 %v388, %v390
    %v392 = vrot.slane %v376, %v391
    %v394 = vunpack.c.l.s4 1966171168
    %v395 = vunpack.c.0.s8 %v394
    %v396 = vlaneseq
    %v397 = vshrl.u32 %v396, 7
    %v398 = vsub.s32 %v395, %v397
    %v399 = vrot.slane %v377, %v398
    %v401 = vunpack.c.l.s4 1966171168
    %v402 = vunpack.c.0.s8 %v401
    %v403 = vlaneseq
    %v404 = vshrl.u32 %v403, 7
    %v405 = vsub.s32 %v402, %v404
    %v406 = vrot.slane %v378, %v405
    %v407 = vcombine.high %v385, %v385
    %v408 = vcombine.high %v392, %v392
    %v409 = vcombine.high %v399, %v399
    %v410 = vcombine.high %v406, %v406
    %v675 = vunpack.c.l.b16 %v83
    %v676 = vunpack.c.h.b16 %v83
    %v677 = vunpack.c.l.b16 %v84
    %v678 = vunpack.c.h.b16 %v84
    %v679 = vunpack.c.l.b16 %v85
    %v680 = vunpack.c.h.b16 %v85
    %v681 = vunpack.c.l.b16 %v86
    %v682 = vunpack.c.h.b16 %v86
    %v683 = vunpack.c.l.b16 %v87
    %v684 = vunpack.c.h.b16 %v87
    %v685 = vunpack.c.l.b16 %v88
    %v686 = vunpack.c.h.b16 %v88
    %v687 = vunpack.c.l.b16 %v89
    %v688 = vunpack.c.h.b16 %v89
    %v689 = vunpack.c.l.b16 %v90
    %v690 = vunpack.c.h.b16 %v90
    %v691 = vunpack.c.l.b16 %v91
    %v692 = vunpack.c.h.b16 %v91
    %v693 = vunpack.c.l.b16 %v92
    %v694 = vunpack.c.h.b16 %v92
    %v695 = vunpack.c.l.b16 %v93
    %v696 = vunpack.c.h.b16 %v93
    %v697 = vunpack.c.l.b16 %v94
    %v698 = vunpack.c.h.b16 %v94
    %v699 = vunpack.c.l.b16 %v95
    %v700 = vunpack.c.h.b16 %v95
    %v701 = vunpack.c.l.b16 %v96
    %v702 = vunpack.c.h.b16 %v96
    %v703 = vunpack.c.l.b16 %v97
    %v704 = vunpack.c.h.b16 %v97
    %v705 = vunpack.c.l.b16 %v98
    %v706 = vunpack.c.h.b16 %v98
    %v707 = vunpack.c.l.b16 %v99
    %v708 = vunpack.c.h.b16 %v99
    %v709 = vunpack.c.l.b16 %v100
    %v710 = vunpack.c.h.b16 %v100
    %v711 = vunpack.c.l.b16 %v101
    %v712 = vunpack.c.h.b16 %v101
    %v713 = vunpack.c.l.b16 %v102
    %v714 = vunpack.c.h.b16 %v102
    %v715 = vunpack.c.l.b16 %v103
    %v716 = vunpack.c.h.b16 %v103
    %v717 = vunpack.c.l.b16 %v104
    %v718 = vunpack.c.h.b16 %v104
    %v719 = vunpack.c.l.b16 %v105
    %v720 = vunpack.c.h.b16 %v105
    %v721 = vunpack.c.l.b16 %v106
    %v722 = vunpack.c.h.b16 %v106
    %v723 = vunpack.c.l.b16 %v107
    %v724 = vunpack.c.h.b16 %v107
    %v725 = vunpack.c.l.b16 %v108
    %v726 = vunpack.c.h.b16 %v108
    %v727 = vunpack.c.l.b16 %v109
    %v728 = vunpack.c.h.b16 %v109
    %v729 = vunpack.c.l.b16 %v110
    %v730 = vunpack.c.h.b16 %v110
    %v731 = vunpack.c.l.b16 %v111
    %v732 = vunpack.c.h.b16 %v111
    %v733 = vunpack.c.l.b16 %v112
    %v734 = vunpack.c.h.b16 %v112
    %v735 = vunpack.c.l.b16 %v113
    %v736 = vunpack.c.h.b16 %v113
    %v737 = vunpack.c.l.b16 %v114
    %v738 = vunpack.c.h.b16 %v114
    %v739 = vunpack.c.l.b16 %v115
    %v740 = vunpack.c.h.b16 %v115
    %v741 = vunpack.c.l.b16 %v116
    %v742 = vunpack.c.h.b16 %v116
    %v743 = vunpack.c.l.b16 %v117
    %v744 = vunpack.c.h.b16 %v117
    %v745 = vunpack.c.l.b16 %v118
    %v746 = vunpack.c.h.b16 %v118
    %v747 = vunpack.c.l.b16 %v119
    %v748 = vunpack.c.h.b16 %v119
    %v749 = vunpack.c.l.b16 %v120
    %v750 = vunpack.c.h.b16 %v120
    %v751 = vunpack.c.l.b16 %v121
    %v752 = vunpack.c.h.b16 %v121
    %v753 = vunpack.c.l.b16 %v122
    %v754 = vunpack.c.h.b16 %v122
    %v755 = vunpack.c.l.b16 %v123
    %v756 = vunpack.c.h.b16 %v123
    %v757 = vunpack.c.l.b16 %v124
    %v758 = vunpack.c.h.b16 %v124
    %v759 = vunpack.c.l.b16 %v125
    %v760 = vunpack.c.h.b16 %v125
    %v761 = vunpack.c.l.b16 %v126
    %v762 = vunpack.c.h.b16 %v126
    %v763 = vunpack.c.l.b16 %v127
    %v764 = vunpack.c.h.b16 %v127
    %v765 = vunpack.c.l.b16 %v128
    %v766 = vunpack.c.h.b16 %v128
    %v767 = vunpack.c.l.b16 %v129
    %v768 = vunpack.c.h.b16 %v129
    %v769 = vunpack.c.l.b16 %v130
    %v770 = vunpack.c.h.b16 %v130
    %v771 = vunpack.c.l.b16 %v131
    %v772 = vunpack.c.h.b16 %v131
    %v773 = vunpack.c.l.b16 %v132
    %v774 = vunpack.c.h.b16 %v132
    %v775 = vunpack.c.l.b16 %v133
    %v776 = vunpack.c.h.b16 %v133
    %v777 = vunpack.c.l.b16 %v134
    %v778 = vunpack.c.h.b16 %v134
    %v779 = vunpack.c.l.b16 %v135
    %v780 = vunpack.c.h.b16 %v135
    %v781 = vunpack.c.l.b16 %v136
    %v782 = vunpack.c.h.b16 %v136
    %v783 = vunpack.c.l.b16 %v137
    %v784 = vunpack.c.h.b16 %v137
    %v785 = vunpack.c.l.b16 %v138
    %v786 = vunpack.c.h.b16 %v138
    %v787 = vunpack.c.l.b16 %v139
    %v788 = vunpack.c.h.b16 %v139
    %v789 = vunpack.c.l.b16 %v140
    %v790 = vunpack.c.h.b16 %v140
    %v791 = vunpack.c.l.b16 %v141
    %v792 = vunpack.c.h.b16 %v141
    %v793 = vunpack.c.l.b16 %v142
    %v794 = vunpack.c.h.b16 %v142
    %v795 = vunpack.c.l.b16 %v143
    %v796 = vunpack.c.h.b16 %v143
    %v797 = vunpack.c.l.b16 %v144
    %v798 = vunpack.c.h.b16 %v144
    %v799 = vunpack.c.l.b16 %v145
    %v800 = vunpack.c.h.b16 %v145
    %v801 = vunpack.c.l.b16 %v146
    %v802 = vunpack.c.h.b16 %v146
    %v803 = vunpack.c.l.b16 %v147
    %v804 = vunpack.c.h.b16 %v147
    %v805 = vunpack.c.l.b16 %v148
    %v806 = vunpack.c.h.b16 %v148
    %v807 = vunpack.c.l.b16 %v149
    %v808 = vunpack.c.h.b16 %v149
    %v809 = vunpack.c.l.b16 %v150
    %v810 = vunpack.c.h.b16 %v150
    %v811 = vunpack.c.l.b16 %v151
    %v812 = vunpack.c.h.b16 %v151
    %v813 = vunpack.c.l.b16 %v152
    %v814 = vunpack.c.h.b16 %v152
    %v815 = vunpack.c.l.b16 %v153
    %v816 = vunpack.c.h.b16 %v153
    %v817 = vunpack.c.l.b16 %v154
    %v818 = vunpack.c.h.b16 %v154
    %v819 = vunpack.c.l.b16 %v155
    %v820 = vunpack.c.h.b16 %v155
    %v821 = vunpack.c.l.b16 %v156
    %v822 = vunpack.c.h.b16 %v156
    %v823 = vunpack.c.l.b16 %v157
    %v824 = vunpack.c.h.b16 %v157
    %v825 = vunpack.c.l.b16 %v158
    %v826 = vunpack.c.h.b16 %v158
    %v827 = vunpack.c.l.b16 %v159
    %v828 = vunpack.c.h.b16 %v159
    %v829 = vunpack.c.l.b16 %v160
    %v830 = vunpack.c.h.b16 %v160
    %v831 = vunpack.c.l.b16 %v161
    %v832 = vunpack.c.h.b16 %v161
    %v833 = vunpack.c.l.b16 %v162
    %v834 = vunpack.c.h.b16 %v162
    %v835 = vunpack.c.l.b16 %v163
    %v836 = vunpack.c.h.b16 %v163
    %v837 = vunpack.c.l.b16 %v164
    %v838 = vunpack.c.h.b16 %v164
    %v839 = vunpack.c.l.b16 %v165
    %v840 = vunpack.c.h.b16 %v165
    %v841 = vunpack.c.l.b16 %v166
    %v842 = vunpack.c.h.b16 %v166
    %v843 = vunpack.c.l.b16 %v167
    %v844 = vunpack.c.h.b16 %v167
    %v845 = vunpack.c.l.b16 %v168
    %v846 = vunpack.c.h.b16 %v168
    %v847 = vunpack.c.l.b16 %v169
    %v848 = vunpack.c.h.b16 %v169
    %v849 = vunpack.c.l.b16 %v170
    %v850 = vunpack.c.h.b16 %v170
    %v851 = vunpack.c.l.b16 %v171
    %v852 = vunpack.c.h.b16 %v171
    %v853 = vunpack.c.l.b16 %v172
    %v854 = vunpack.c.h.b16 %v172
    %v855 = vunpack.c.l.b16 %v173
    %v856 = vunpack.c.h.b16 %v173
    %v857 = vunpack.c.l.b16 %v174
    %v858 = vunpack.c.h.b16 %v174
    %v859 = vunpack.c.l.b16 %v175
    %v860 = vunpack.c.h.b16 %v175
    %v861 = vunpack.c.l.b16 %v176
    %v862 = vunpack.c.h.b16 %v176
    %v863 = vunpack.c.l.b16 %v177
    %v864 = vunpack.c.h.b16 %v177
    %v865 = vunpack.c.l.b16 %v178
    %v866 = vunpack.c.h.b16 %v178
    %v867 = vunpack.c.l.b16 %v179
    %v868 = vunpack.c.h.b16 %v179
    %v869 = vunpack.c.l.b16 %v180
    %v870 = vunpack.c.h.b16 %v180
    %v871 = vunpack.c.l.b16 %v181
    %v872 = vunpack.c.h.b16 %v181
    %v873 = vunpack.c.l.b16 %v182
    %v874 = vunpack.c.h.b16 %v182
    %v875 = vunpack.c.l.b16 %v183
    %v876 = vunpack.c.h.b16 %v183
    %v877 = vunpack.c.l.b16 %v184
    %v878 = vunpack.c.h.b16 %v184
    %v879 = vunpack.c.l.b16 %v185
    %v880 = vunpack.c.h.b16 %v185
    %v881 = vunpack.c.l.b16 %v186
    %v882 = vunpack.c.h.b16 %v186
    %v883 = vunpack.c.l.b16 %v187
    %v884 = vunpack.c.h.b16 %v187
    %v885 = vunpack.c.l.b16 %v188
    %v886 = vunpack.c.h.b16 %v188
    %v887 = vunpack.c.l.b16 %v189
    %v888 = vunpack.c.h.b16 %v189
    %v889 = vunpack.c.l.b16 %v190
    %v890 = vunpack.c.h.b16 %v190
    %v891 = vunpack.c.l.b16 %v191
    %v892 = vunpack.c.h.b16 %v191
    %v893 = vunpack.c.l.b16 %v192
    %v894 = vunpack.c.h.b16 %v192
    %v895 = vunpack.c.l.b16 %v193
    %v896 = vunpack.c.h.b16 %v193
    %v897 = vunpack.c.l.b16 %v194
    %v898 = vunpack.c.h.b16 %v194
    %v899 = vunpack.c.l.b16 %v195
    %v900 = vunpack.c.h.b16 %v195
    %v901 = vunpack.c.l.b16 %v196
    %v902 = vunpack.c.h.b16 %v196
    %v903 = vunpack.c.l.b16 %v197
    %v904 = vunpack.c.h.b16 %v197
    %v905 = vunpack.c.l.b16 %v198
    %v906 = vunpack.c.h.b16 %v198
    %v907 = vunpack.c.l.b16 %v199
    %v908 = vunpack.c.h.b16 %v199
    %v909 = vunpack.c.l.b16 %v200
    %v910 = vunpack.c.h.b16 %v200
    %v911 = vunpack.c.l.b16 %v201
    %v912 = vunpack.c.h.b16 %v201
    %v913 = vunpack.c.l.b16 %v202
    %v914 = vunpack.c.h.b16 %v202
    %v915 = vunpack.c.l.b16 %v203
    %v916 = vunpack.c.h.b16 %v203
    %v917 = vunpack.c.l.b16 %v204
    %v918 = vunpack.c.h.b16 %v204
    %v919 = vunpack.c.l.b16 %v205
    %v920 = vunpack.c.h.b16 %v205
    %v921 = vunpack.c.l.b16 %v206
    %v922 = vunpack.c.h.b16 %v206
    %v923 = vunpack.c.l.b16 %v207
    %v924 = vunpack.c.h.b16 %v207
    %v925 = vunpack.c.l.b16 %v208
    %v926 = vunpack.c.h.b16 %v208
    %v927 = vunpack.c.l.b16 %v209
    %v928 = vunpack.c.h.b16 %v209
    %v929 = vunpack.c.l.b16 %v210
    %v930 = vunpack.c.h.b16 %v210
    %v931 = vunpack.c.l.b16 %v211
    %v932 = vunpack.c.h.b16 %v211
    %v933 = vunpack.c.l.b16 %v212
    %v934 = vunpack.c.h.b16 %v212
    %v935 = vunpack.c.l.b16 %v213
    %v936 = vunpack.c.h.b16 %v213
    %v937 = vunpack.c.l.b16 %v214
    %v938 = vunpack.c.h.b16 %v214
    %v939 = vunpack.c.l.b16 %v215
    %v940 = vunpack.c.h.b16 %v215
    %v941 = vunpack.c.l.b16 %v216
    %v942 = vunpack.c.h.b16 %v216
    %v943 = vunpack.c.l.b16 %v217
    %v944 = vunpack.c.h.b16 %v217
    %v945 = vunpack.c.l.b16 %v218
    %v946 = vunpack.c.h.b16 %v218
    %v947 = vunpack.c.l.b16 %v219
    %v948 = vunpack.c.h.b16 %v219
    %v949 = vunpack.c.l.b16 %v220
    %v950 = vunpack.c.h.b16 %v220
    %v951 = vunpack.c.l.b16 %v221
    %v952 = vunpack.c.h.b16 %v221
    %v953 = vunpack.c.l.b16 %v222
    %v954 = vunpack.c.h.b16 %v222
    %v955 = vunpack.c.l.b16 %v223
    %v956 = vunpack.c.h.b16 %v223
    %v957 = vunpack.c.l.b16 %v224
    %v958 = vunpack.c.h.b16 %v224
    %v959 = vunpack.c.l.b16 %v225
    %v960 = vunpack.c.h.b16 %v225
    %v961 = vunpack.c.l.b16 %v226
    %v962 = vunpack.c.h.b16 %v226
    %v963 = vunpack.c.l.b16 %v227
    %v964 = vunpack.c.h.b16 %v227
    %v965 = vunpack.c.l.b16 %v228
    %v966 = vunpack.c.h.b16 %v228
    %v967 = vunpack.c.l.b16 %v229
    %v968 = vunpack.c.h.b16 %v229
    %v969 = vunpack.c.l.b16 %v230
    %v970 = vunpack.c.h.b16 %v230
    %v971 = vunpack.c.l.b16 %v231
    %v972 = vunpack.c.h.b16 %v231
    %v973 = vunpack.c.l.b16 %v232
    %v974 = vunpack.c.h.b16 %v232
    %v975 = vunpack.c.l.b16 %v233
    %v976 = vunpack.c.h.b16 %v233
    %v977 = vunpack.c.l.b16 %v234
    %v978 = vunpack.c.h.b16 %v234
    %v979 = vunpack.c.l.b16 %v235
    %v980 = vunpack.c.h.b16 %v235
    %v981 = vunpack.c.l.b16 %v236
    %v982 = vunpack.c.h.b16 %v236
    %v983 = vunpack.c.l.b16 %v237
    %v984 = vunpack.c.h.b16 %v237
    %v985 = vunpack.c.l.b16 %v238
    %v986 = vunpack.c.h.b16 %v238
    %v987 = vunpack.c.l.b16 %v239
    %v988 = vunpack.c.h.b16 %v239
    %v989 = vunpack.c.l.b16 %v240
    %v990 = vunpack.c.h.b16 %v240
    %v991 = vunpack.c.l.b16 %v241
    %v992 = vunpack.c.h.b16 %v241
    %v993 = vunpack.c.l.b16 %v242
    %v994 = vunpack.c.h.b16 %v242
    %v995 = vunpack.c.l.b16 %v243
    %v996 = vunpack.c.h.b16 %v243
    %v997 = vunpack.c.l.b16 %v244
    %v998 = vunpack.c.h.b16 %v244
    %v999 = vunpack.c.l.b16 %v245
    %v1000 = vunpack.c.h.b16 %v245
    %v1001 = vunpack.c.l.b16 %v246
    %v1002 = vunpack.c.h.b16 %v246
    %v1003 = vunpack.c.l.b16 %v247
    %v1004 = vunpack.c.h.b16 %v247
    %v1005 = vunpack.c.l.b16 %v248
    %v1006 = vunpack.c.h.b16 %v248
    %v1007 = vunpack.c.l.b16 %v249
    %v1008 = vunpack.c.h.b16 %v249
    %v1009 = vunpack.c.l.b16 %v250
    %v1010 = vunpack.c.h.b16 %v250
    %v1011 = vunpack.c.l.b16 %v251
    %v1012 = vunpack.c.h.b16 %v251
    %v1013 = vunpack.c.l.b16 %v252
    %v1014 = vunpack.c.h.b16 %v252
    %v1015 = vunpack.c.l.b16 %v253
    %v1016 = vunpack.c.h.b16 %v253
    %v1017 = vunpack.c.l.b16 %v254
    %v1018 = vunpack.c.h.b16 %v254
    %v1019 = vunpack.c.l.b16 %v255
    %v1020 = vunpack.c.h.b16 %v255
    %v1021 = vunpack.c.l.b16 %v256
    %v1022 = vunpack.c.h.b16 %v256
    %v1023 = vunpack.c.l.b16 %v257
    %v1024 = vunpack.c.h.b16 %v257
    %v1025 = vunpack.c.l.b16 %v258
    %v1026 = vunpack.c.h.b16 %v258
    %v1027 = vunpack.c.l.b16 %v259
    %v1028 = vunpack.c.h.b16 %v259
    %v1029 = vunpack.c.l.b16 %v260
    %v1030 = vunpack.c.h.b16 %v260
    %v1031 = vunpack.c.l.b16 %v261
    %v1032 = vunpack.c.h.b16 %v261
    %v1033 = vunpack.c.l.b16 %v262
    %v1034 = vunpack.c.h.b16 %v262
    %v1035 = vunpack.c.l.b16 %v263
    %v1036 = vunpack.c.h.b16 %v263
    %v1037 = vunpack.c.l.b16 %v264
    %v1038 = vunpack.c.h.b16 %v264
    %v1039 = vunpack.c.l.b16 %v265
    %v1040 = vunpack.c.h.b16 %v265
    %v1041 = vunpack.c.l.b16 %v266
    %v1042 = vunpack.c.h.b16 %v266
    %v1043 = vunpack.c.l.b16 %v267
    %v1044 = vunpack.c.h.b16 %v267
    %v1045 = vunpack.c.l.b16 %v268
    %v1046 = vunpack.c.h.b16 %v268
    %v1047 = vunpack.c.l.b16 %v269
    %v1048 = vunpack.c.h.b16 %v269
    %v1049 = vunpack.c.l.b16 %v270
    %v1050 = vunpack.c.h.b16 %v270
    %v1051 = vunpack.c.l.b16 %v271
    %v1052 = vunpack.c.h.b16 %v271
    %v1053 = vunpack.c.l.b16 %v272
    %v1054 = vunpack.c.h.b16 %v272
    %v1055 = vunpack.c.l.b16 %v273
    %v1056 = vunpack.c.h.b16 %v273
    %v1057 = vunpack.c.l.b16 %v274
    %v1058 = vunpack.c.h.b16 %v274
    %v1059 = vunpack.c.l.b16 %v275
    %v1060 = vunpack.c.h.b16 %v275
    %v1061 = vunpack.c.l.b16 %v276
    %v1062 = vunpack.c.h.b16 %v276
    %v1063 = vunpack.c.l.b16 %v277
    %v1064 = vunpack.c.h.b16 %v277
    %v1065 = vunpack.c.l.b16 %v278
    %v1066 = vunpack.c.h.b16 %v278
    %v1067 = vunpack.c.l.b16 %v279
    %v1068 = vunpack.c.h.b16 %v279
    %v1069 = vunpack.c.l.b16 %v280
    %v1070 = vunpack.c.h.b16 %v280
    %v1071 = vunpack.c.l.b16 %v281
    %v1072 = vunpack.c.h.b16 %v281
    %v1073 = vunpack.c.l.b16 %v282
    %v1074 = vunpack.c.h.b16 %v282
    %v1075 = vunpack.c.l.b16 %v283
    %v1076 = vunpack.c.h.b16 %v283
    %v1077 = vunpack.c.l.b16 %v284
    %v1078 = vunpack.c.h.b16 %v284
    %v1079 = vunpack.c.l.b16 %v285
    %v1080 = vunpack.c.h.b16 %v285
    %v1081 = vunpack.c.l.b16 %v286
    %v1082 = vunpack.c.h.b16 %v286
    %v1083 = vunpack.c.l.b16 %v287
    %v1084 = vunpack.c.h.b16 %v287
    %v1085 = vunpack.c.l.b16 %v288
    %v1086 = vunpack.c.h.b16 %v288
    %v1087 = vunpack.c.l.b16 %v289
    %v1088 = vunpack.c.h.b16 %v289
    %v1089 = vunpack.c.l.b16 %v290
    %v1090 = vunpack.c.h.b16 %v290
    %v1091 = vunpack.c.l.b16 %v291
    %v1092 = vunpack.c.h.b16 %v291
    %v1093 = vunpack.c.l.b16 %v292
    %v1094 = vunpack.c.h.b16 %v292
    %v1095 = vunpack.c.l.b16 %v293
    %v1096 = vunpack.c.h.b16 %v293
    %v1097 = vunpack.c.l.b16 %v294
    %v1098 = vunpack.c.h.b16 %v294
    %v1099 = vunpack.c.l.b16 %v295
    %v1100 = vunpack.c.h.b16 %v295
    %v1101 = vunpack.c.l.b16 %v296
    %v1102 = vunpack.c.h.b16 %v296
    %v1103 = vunpack.c.l.b16 %v297
    %v1104 = vunpack.c.h.b16 %v297
    %v1105 = vunpack.c.l.b16 %v298
    %v1106 = vunpack.c.h.b16 %v298
    %v1107 = vunpack.c.l.b16 %v299
    %v1108 = vunpack.c.h.b16 %v299
    %v1109 = vunpack.c.l.b16 %v300
    %v1110 = vunpack.c.h.b16 %v300
    %v1111 = vunpack.c.l.b16 %v301
    %v1112 = vunpack.c.h.b16 %v301
    %v1113 = vunpack.c.l.b16 %v302
    %v1114 = vunpack.c.h.b16 %v302
    %v1115 = vunpack.c.l.b16 %v303
    %v1116 = vunpack.c.h.b16 %v303
    %v1117 = vunpack.c.l.b16 %v304
    %v1118 = vunpack.c.h.b16 %v304
    %v1119 = vunpack.c.l.b16 %v305
    %v1120 = vunpack.c.h.b16 %v305
    %v1121 = vunpack.c.l.b16 %v306
    %v1122 = vunpack.c.h.b16 %v306
    %v1123 = vunpack.c.l.b16 %v307
    %v1124 = vunpack.c.h.b16 %v307
    %v1125 = vunpack.c.l.b16 %v308
    %v1126 = vunpack.c.h.b16 %v308
    %v1127 = vunpack.c.l.b16 %v309
    %v1128 = vunpack.c.h.b16 %v309
    %v1129 = vunpack.c.l.b16 %v310
    %v1130 = vunpack.c.h.b16 %v310
    %v1131 = vunpack.c.l.b16 %v311
    %v1132 = vunpack.c.h.b16 %v311
    %v1133 = vunpack.c.l.b16 %v312
    %v1134 = vunpack.c.h.b16 %v312
    %v1135 = vunpack.c.l.b16 %v313
    %v1136 = vunpack.c.h.b16 %v313
    %v1137 = vunpack.c.l.b16 %v314
    %v1138 = vunpack.c.h.b16 %v314
    %v1139 = vunpack.c.l.b16 %v315
    %v1140 = vunpack.c.h.b16 %v315
    %v1141 = vunpack.c.l.b16 %v316
    %v1142 = vunpack.c.h.b16 %v316
    %v1143 = vunpack.c.l.b16 %v317
    %v1144 = vunpack.c.h.b16 %v317
    %v1145 = vunpack.c.l.b16 %v318
    %v1146 = vunpack.c.h.b16 %v318
    %v1147 = vunpack.c.l.b16 %v319
    %v1148 = vunpack.c.h.b16 %v319
    %v1149 = vunpack.c.l.b16 %v320
    %v1150 = vunpack.c.h.b16 %v320
    %v1151 = vunpack.c.l.b16 %v321
    %v1152 = vunpack.c.h.b16 %v321
    %v1153 = vunpack.c.l.b16 %v322
    %v1154 = vunpack.c.h.b16 %v322
    %v1155 = vunpack.c.l.b16 %v323
    %v1156 = vunpack.c.h.b16 %v323
    %v1157 = vunpack.c.l.b16 %v324
    %v1158 = vunpack.c.h.b16 %v324
    %v1159 = vunpack.c.l.b16 %v325
    %v1160 = vunpack.c.h.b16 %v325
    %v1161 = vunpack.c.l.b16 %v326
    %v1162 = vunpack.c.h.b16 %v326
    %v1163 = vunpack.c.l.b16 %v327
    %v1164 = vunpack.c.h.b16 %v327
    %v1165 = vunpack.c.l.b16 %v328
    %v1166 = vunpack.c.h.b16 %v328
    %v1167 = vunpack.c.l.b16 %v329
    %v1168 = vunpack.c.h.b16 %v329
    %v1169 = vunpack.c.l.b16 %v330
    %v1170 = vunpack.c.h.b16 %v330
    %v1171 = vunpack.c.l.b16 %v331
    %v1172 = vunpack.c.h.b16 %v331
    %v1173 = vunpack.c.l.b16 %v332
    %v1174 = vunpack.c.h.b16 %v332
    %v1175 = vunpack.c.l.b16 %v333
    %v1176 = vunpack.c.h.b16 %v333
    %v1177 = vunpack.c.l.b16 %v334
    %v1178 = vunpack.c.h.b16 %v334
    %v1179 = vunpack.c.l.b16 %v335
    %v1180 = vunpack.c.h.b16 %v335
    %v1181 = vunpack.c.l.b16 %v336
    %v1182 = vunpack.c.h.b16 %v336
    %v1183 = vunpack.c.l.b16 %v337
    %v1184 = vunpack.c.h.b16 %v337
    %v1185 = vunpack.c.l.b16 %v338
    %v1186 = vunpack.c.h.b16 %v338
    %v1187 = vpack.c.b16 %v679, %v675
    %v1188 = vpack.c.b16 %v680, %v676
    %v1189 = vpack.c.b16 %v681, %v677
    %v1190 = vpack.c.b16 %v682, %v678
    %v1191 = vpack.c.b16 %v687, %v683
    %v1192 = vpack.c.b16 %v688, %v684
    %v1193 = vpack.c.b16 %v689, %v685
    %v1194 = vpack.c.b16 %v690, %v686
    %v1195 = vpack.c.b16 %v695, %v691
    %v1196 = vpack.c.b16 %v696, %v692
    %v1197 = vpack.c.b16 %v697, %v693
    %v1198 = vpack.c.b16 %v698, %v694
    %v1199 = vpack.c.b16 %v703, %v699
    %v1200 = vpack.c.b16 %v704, %v700
    %v1201 = vpack.c.b16 %v705, %v701
    %v1202 = vpack.c.b16 %v706, %v702
    %v1203 = vpack.c.b16 %v711, %v707
    %v1204 = vpack.c.b16 %v712, %v708
    %v1205 = vpack.c.b16 %v713, %v709
    %v1206 = vpack.c.b16 %v714, %v710
    %v1207 = vpack.c.b16 %v719, %v715
    %v1208 = vpack.c.b16 %v720, %v716
    %v1209 = vpack.c.b16 %v721, %v717
    %v1210 = vpack.c.b16 %v722, %v718
    %v1211 = vpack.c.b16 %v727, %v723
    %v1212 = vpack.c.b16 %v728, %v724
    %v1213 = vpack.c.b16 %v729, %v725
    %v1214 = vpack.c.b16 %v730, %v726
    %v1215 = vpack.c.b16 %v735, %v731
    %v1216 = vpack.c.b16 %v736, %v732
    %v1217 = vpack.c.b16 %v737, %v733
    %v1218 = vpack.c.b16 %v738, %v734
    %v1219 = vpack.c.b16 %v743, %v739
    %v1220 = vpack.c.b16 %v744, %v740
    %v1221 = vpack.c.b16 %v745, %v741
    %v1222 = vpack.c.b16 %v746, %v742
    %v1223 = vpack.c.b16 %v751, %v747
    %v1224 = vpack.c.b16 %v752, %v748
    %v1225 = vpack.c.b16 %v753, %v749
    %v1226 = vpack.c.b16 %v754, %v750
    %v1227 = vpack.c.b16 %v759, %v755
    %v1228 = vpack.c.b16 %v760, %v756
    %v1229 = vpack.c.b16 %v761, %v757
    %v1230 = vpack.c.b16 %v762, %v758
    %v1231 = vpack.c.b16 %v767, %v763
    %v1232 = vpack.c.b16 %v768, %v764
    %v1233 = vpack.c.b16 %v769, %v765
    %v1234 = vpack.c.b16 %v770, %v766
    %v1235 = vpack.c.b16 %v775, %v771
    %v1236 = vpack.c.b16 %v776, %v772
    %v1237 = vpack.c.b16 %v777, %v773
    %v1238 = vpack.c.b16 %v778, %v774
    %v1239 = vpack.c.b16 %v783, %v779
    %v1240 = vpack.c.b16 %v784, %v780
    %v1241 = vpack.c.b16 %v785, %v781
    %v1242 = vpack.c.b16 %v786, %v782
    %v1243 = vpack.c.b16 %v791, %v787
    %v1244 = vpack.c.b16 %v792, %v788
    %v1245 = vpack.c.b16 %v793, %v789
    %v1246 = vpack.c.b16 %v794, %v790
    %v1247 = vpack.c.b16 %v799, %v795
    %v1248 = vpack.c.b16 %v800, %v796
    %v1249 = vpack.c.b16 %v801, %v797
    %v1250 = vpack.c.b16 %v802, %v798
    %v1251 = vpack.c.b16 %v807, %v803
    %v1252 = vpack.c.b16 %v808, %v804
    %v1253 = vpack.c.b16 %v809, %v805
    %v1254 = vpack.c.b16 %v810, %v806
    %v1255 = vpack.c.b16 %v815, %v811
    %v1256 = vpack.c.b16 %v816, %v812
    %v1257 = vpack.c.b16 %v817, %v813
    %v1258 = vpack.c.b16 %v818, %v814
    %v1259 = vpack.c.b16 %v823, %v819
    %v1260 = vpack.c.b16 %v824, %v820
    %v1261 = vpack.c.b16 %v825, %v821
    %v1262 = vpack.c.b16 %v826, %v822
    %v1263 = vpack.c.b16 %v831, %v827
    %v1264 = vpack.c.b16 %v832, %v828
    %v1265 = vpack.c.b16 %v833, %v829
    %v1266 = vpack.c.b16 %v834, %v830
    %v1267 = vpack.c.b16 %v839, %v835
    %v1268 = vpack.c.b16 %v840, %v836
    %v1269 = vpack.c.b16 %v841, %v837
    %v1270 = vpack.c.b16 %v842, %v838
    %v1271 = vpack.c.b16 %v847, %v843
    %v1272 = vpack.c.b16 %v848, %v844
    %v1273 = vpack.c.b16 %v849, %v845
    %v1274 = vpack.c.b16 %v850, %v846
    %v1275 = vpack.c.b16 %v855, %v851
    %v1276 = vpack.c.b16 %v856, %v852
    %v1277 = vpack.c.b16 %v857, %v853
    %v1278 = vpack.c.b16 %v858, %v854
    %v1279 = vpack.c.b16 %v863, %v859
    %v1280 = vpack.c.b16 %v864, %v860
    %v1281 = vpack.c.b16 %v865, %v861
    %v1282 = vpack.c.b16 %v866, %v862
    %v1283 = vpack.c.b16 %v871, %v867
    %v1284 = vpack.c.b16 %v872, %v868
    %v1285 = vpack.c.b16 %v873, %v869
    %v1286 = vpack.c.b16 %v874, %v870
    %v1287 = vpack.c.b16 %v879, %v875
    %v1288 = vpack.c.b16 %v880, %v876
    %v1289 = vpack.c.b16 %v881, %v877
    %v1290 = vpack.c.b16 %v882, %v878
    %v1291 = vpack.c.b16 %v887, %v883
    %v1292 = vpack.c.b16 %v888, %v884
    %v1293 = vpack.c.b16 %v889, %v885
    %v1294 = vpack.c.b16 %v890, %v886
    %v1295 = vpack.c.b16 %v895, %v891
    %v1296 = vpack.c.b16 %v896, %v892
    %v1297 = vpack.c.b16 %v897, %v893
    %v1298 = vpack.c.b16 %v898, %v894
    %v1299 = vpack.c.b16 %v903, %v899
    %v1300 = vpack.c.b16 %v904, %v900
    %v1301 = vpack.c.b16 %v905, %v901
    %v1302 = vpack.c.b16 %v906, %v902
    %v1303 = vpack.c.b16 %v911, %v907
    %v1304 = vpack.c.b16 %v912, %v908
    %v1305 = vpack.c.b16 %v913, %v909
    %v1306 = vpack.c.b16 %v914, %v910
    %v1307 = vpack.c.b16 %v919, %v915
    %v1308 = vpack.c.b16 %v920, %v916
    %v1309 = vpack.c.b16 %v921, %v917
    %v1310 = vpack.c.b16 %v922, %v918
    %v1311 = vpack.c.b16 %v927, %v923
    %v1312 = vpack.c.b16 %v928, %v924
    %v1313 = vpack.c.b16 %v929, %v925
    %v1314 = vpack.c.b16 %v930, %v926
    %v1315 = vpack.c.b16 %v935, %v931
    %v1316 = vpack.c.b16 %v936, %v932
    %v1317 = vpack.c.b16 %v937, %v933
    %v1318 = vpack.c.b16 %v938, %v934
    %v1319 = vpack.c.b16 %v943, %v939
    %v1320 = vpack.c.b16 %v944, %v940
    %v1321 = vpack.c.b16 %v945, %v941
    %v1322 = vpack.c.b16 %v946, %v942
    %v1323 = vpack.c.b16 %v951, %v947
    %v1324 = vpack.c.b16 %v952, %v948
    %v1325 = vpack.c.b16 %v953, %v949
    %v1326 = vpack.c.b16 %v954, %v950
    %v1327 = vpack.c.b16 %v959, %v955
    %v1328 = vpack.c.b16 %v960, %v956
    %v1329 = vpack.c.b16 %v961, %v957
    %v1330 = vpack.c.b16 %v962, %v958
    %v1331 = vpack.c.b16 %v967, %v963
    %v1332 = vpack.c.b16 %v968, %v964
    %v1333 = vpack.c.b16 %v969, %v965
    %v1334 = vpack.c.b16 %v970, %v966
    %v1335 = vpack.c.b16 %v975, %v971
    %v1336 = vpack.c.b16 %v976, %v972
    %v1337 = vpack.c.b16 %v977, %v973
    %v1338 = vpack.c.b16 %v978, %v974
    %v1339 = vpack.c.b16 %v983, %v979
    %v1340 = vpack.c.b16 %v984, %v980
    %v1341 = vpack.c.b16 %v985, %v981
    %v1342 = vpack.c.b16 %v986, %v982
    %v1343 = vpack.c.b16 %v991, %v987
    %v1344 = vpack.c.b16 %v992, %v988
    %v1345 = vpack.c.b16 %v993, %v989
    %v1346 = vpack.c.b16 %v994, %v990
    %v1347 = vpack.c.b16 %v999, %v995
    %v1348 = vpack.c.b16 %v1000, %v996
    %v1349 = vpack.c.b16 %v1001, %v997
    %v1350 = vpack.c.b16 %v1002, %v998
    %v1351 = vpack.c.b16 %v1007, %v1003
    %v1352 = vpack.c.b16 %v1008, %v1004
    %v1353 = vpack.c.b16 %v1009, %v1005
    %v1354 = vpack.c.b16 %v1010, %v1006
    %v1355 = vpack.c.b16 %v1015, %v1011
    %v1356 = vpack.c.b16 %v1016, %v1012
    %v1357 = vpack.c.b16 %v1017, %v1013
    %v1358 = vpack.c.b16 %v1018, %v1014
    %v1359 = vpack.c.b16 %v1023, %v1019
    %v1360 = vpack.c.b16 %v1024, %v1020
    %v1361 = vpack.c.b16 %v1025, %v1021
    %v1362 = vpack.c.b16 %v1026, %v1022
    %v1363 = vpack.c.b16 %v1031, %v1027
    %v1364 = vpack.c.b16 %v1032, %v1028
    %v1365 = vpack.c.b16 %v1033, %v1029
    %v1366 = vpack.c.b16 %v1034, %v1030
    %v1367 = vpack.c.b16 %v1039, %v1035
    %v1368 = vpack.c.b16 %v1040, %v1036
    %v1369 = vpack.c.b16 %v1041, %v1037
    %v1370 = vpack.c.b16 %v1042, %v1038
    %v1371 = vpack.c.b16 %v1047, %v1043
    %v1372 = vpack.c.b16 %v1048, %v1044
    %v1373 = vpack.c.b16 %v1049, %v1045
    %v1374 = vpack.c.b16 %v1050, %v1046
    %v1375 = vpack.c.b16 %v1055, %v1051
    %v1376 = vpack.c.b16 %v1056, %v1052
    %v1377 = vpack.c.b16 %v1057, %v1053
    %v1378 = vpack.c.b16 %v1058, %v1054
    %v1379 = vpack.c.b16 %v1063, %v1059
    %v1380 = vpack.c.b16 %v1064, %v1060
    %v1381 = vpack.c.b16 %v1065, %v1061
    %v1382 = vpack.c.b16 %v1066, %v1062
    %v1383 = vpack.c.b16 %v1071, %v1067
    %v1384 = vpack.c.b16 %v1072, %v1068
    %v1385 = vpack.c.b16 %v1073, %v1069
    %v1386 = vpack.c.b16 %v1074, %v1070
    %v1387 = vpack.c.b16 %v1079, %v1075
    %v1388 = vpack.c.b16 %v1080, %v1076
    %v1389 = vpack.c.b16 %v1081, %v1077
    %v1390 = vpack.c.b16 %v1082, %v1078
    %v1391 = vpack.c.b16 %v1087, %v1083
    %v1392 = vpack.c.b16 %v1088, %v1084
    %v1393 = vpack.c.b16 %v1089, %v1085
    %v1394 = vpack.c.b16 %v1090, %v1086
    %v1395 = vpack.c.b16 %v1095, %v1091
    %v1396 = vpack.c.b16 %v1096, %v1092
    %v1397 = vpack.c.b16 %v1097, %v1093
    %v1398 = vpack.c.b16 %v1098, %v1094
    %v1399 = vpack.c.b16 %v1103, %v1099
    %v1400 = vpack.c.b16 %v1104, %v1100
    %v1401 = vpack.c.b16 %v1105, %v1101
    %v1402 = vpack.c.b16 %v1106, %v1102
    %v1403 = vpack.c.b16 %v1111, %v1107
    %v1404 = vpack.c.b16 %v1112, %v1108
    %v1405 = vpack.c.b16 %v1113, %v1109
    %v1406 = vpack.c.b16 %v1114, %v1110
    %v1407 = vpack.c.b16 %v1119, %v1115
    %v1408 = vpack.c.b16 %v1120, %v1116
    %v1409 = vpack.c.b16 %v1121, %v1117
    %v1410 = vpack.c.b16 %v1122, %v1118
    %v1411 = vpack.c.b16 %v1127, %v1123
    %v1412 = vpack.c.b16 %v1128, %v1124
    %v1413 = vpack.c.b16 %v1129, %v1125
    %v1414 = vpack.c.b16 %v1130, %v1126
    %v1415 = vpack.c.b16 %v1135, %v1131
    %v1416 = vpack.c.b16 %v1136, %v1132
    %v1417 = vpack.c.b16 %v1137, %v1133
    %v1418 = vpack.c.b16 %v1138, %v1134
    %v1419 = vpack.c.b16 %v1143, %v1139
    %v1420 = vpack.c.b16 %v1144, %v1140
    %v1421 = vpack.c.b16 %v1145, %v1141
    %v1422 = vpack.c.b16 %v1146, %v1142
    %v1423 = vpack.c.b16 %v1151, %v1147
    %v1424 = vpack.c.b16 %v1152, %v1148
    %v1425 = vpack.c.b16 %v1153, %v1149
    %v1426 = vpack.c.b16 %v1154, %v1150
    %v1427 = vpack.c.b16 %v1159, %v1155
    %v1428 = vpack.c.b16 %v1160, %v1156
    %v1429 = vpack.c.b16 %v1161, %v1157
    %v1430 = vpack.c.b16 %v1162, %v1158
    %v1431 = vpack.c.b16 %v1167, %v1163
    %v1432 = vpack.c.b16 %v1168, %v1164
    %v1433 = vpack.c.b16 %v1169, %v1165
    %v1434 = vpack.c.b16 %v1170, %v1166
    %v1435 = vpack.c.b16 %v1175, %v1171
    %v1436 = vpack.c.b16 %v1176, %v1172
    %v1437 = vpack.c.b16 %v1177, %v1173
    %v1438 = vpack.c.b16 %v1178, %v1174
    %v1439 = vpack.c.b16 %v1183, %v1179
    %v1440 = vpack.c.b16 %v1184, %v1180
    %v1441 = vpack.c.b16 %v1185, %v1181
    %v1442 = vpack.c.b16 %v1186, %v1182
    %1699 = vmatprep.subr.bf16.mxu0 %v1188
    %1700 = vmatpush1.bf16.msra.mxu0 %v1187
    %1701 = vmatprep.subr.bf16.mxu0 %v1192
    %1702 = vmatpush1.bf16.msra.mxu0 %v1191
    %1703 = vmatprep.subr.bf16.mxu0 %v1196
    %1704 = vmatpush1.bf16.msra.mxu0 %v1195
    %1705 = vmatprep.subr.bf16.mxu0 %v1200
    %1706 = vmatpush1.bf16.msra.mxu0 %v1199
    %1707 = vmatprep.subr.bf16.mxu0 %v1204
    %1708 = vmatpush1.bf16.msra.mxu0 %v1203
    %1709 = vmatprep.subr.bf16.mxu0 %v1208
    %1710 = vmatpush1.bf16.msra.mxu0 %v1207
    %1711 = vmatprep.subr.bf16.mxu0 %v1212
    %1712 = vmatpush1.bf16.msra.mxu0 %v1211
    %1713 = vmatprep.subr.bf16.mxu0 %v1216
    %1714 = vmatpush1.bf16.msra.mxu0 %v1215
    %1715 = vmatprep.subr.bf16.mxu0 %v1220
    %1716 = vmatpush1.bf16.msra.mxu0 %v1219
    %1717 = vmatprep.subr.bf16.mxu0 %v1224
    %1718 = vmatpush1.bf16.msra.mxu0 %v1223
    %1719 = vmatprep.subr.bf16.mxu0 %v1228
    %1720 = vmatpush1.bf16.msra.mxu0 %v1227
    %1721 = vmatprep.subr.bf16.mxu0 %v1232
    %1722 = vmatpush1.bf16.msra.mxu0 %v1231
    %1723 = vmatprep.subr.bf16.mxu0 %v1236
    %1724 = vmatpush1.bf16.msra.mxu0 %v1235
    %1725 = vmatprep.subr.bf16.mxu0 %v1240
    %1726 = vmatpush1.bf16.msra.mxu0 %v1239
    %1727 = vmatprep.subr.bf16.mxu0 %v1244
    %1728 = vmatpush1.bf16.msra.mxu0 %v1243
    %1729 = vmatprep.subr.bf16.mxu0 %v1248
    %1730 = vmatpush1.bf16.msra.mxu0 %v1247
    %1731 = vmatprep.mubr.bf16.mxu0 %v399
    %1732 = vmatmul.mubr.bf16.gmra.mrb[0].mxu0 %v385
    %v1733 = vpop.f32.mrb[0].mxu0
    %v1734 = vadd.f32 %v344, %v1733
    %v1735 = vpop.f32.mrb[0].mxu0
    %v1736 = vadd.f32 %v348, %v1735
    %v1737 = vpop.f32.mrb[0].mxu0
    %v1738 = vpop.f32.mrb[0].mxu0
    %1739 = vdwg.mxu0
    %1740 = vmatprep.subr.bf16.mxu0 %v1252
    %1741 = vmatpush1.bf16.msra.mxu0 %v1251
    %1742 = vmatprep.subr.bf16.mxu0 %v1256
    %1743 = vmatpush1.bf16.msra.mxu0 %v1255
    %1744 = vmatprep.subr.bf16.mxu0 %v1260
    %1745 = vmatpush1.bf16.msra.mxu0 %v1259
    %1746 = vmatprep.subr.bf16.mxu0 %v1264
    %1747 = vmatpush1.bf16.msra.mxu0 %v1263
    %1748 = vmatprep.subr.bf16.mxu0 %v1268
    %1749 = vmatpush1.bf16.msra.mxu0 %v1267
    %1750 = vmatprep.subr.bf16.mxu0 %v1272
    %1751 = vmatpush1.bf16.msra.mxu0 %v1271
    %1752 = vmatprep.subr.bf16.mxu0 %v1276
    %1753 = vmatpush1.bf16.msra.mxu0 %v1275
    %1754 = vmatprep.subr.bf16.mxu0 %v1280
    %1755 = vmatpush1.bf16.msra.mxu0 %v1279
    %1756 = vmatprep.subr.bf16.mxu0 %v1284
    %1757 = vmatpush1.bf16.msra.mxu0 %v1283
    %1758 = vmatprep.subr.bf16.mxu0 %v1288
    %1759 = vmatpush1.bf16.msra.mxu0 %v1287
    %1760 = vmatprep.subr.bf16.mxu0 %v1292
    %1761 = vmatpush1.bf16.msra.mxu0 %v1291
    %1762 = vmatprep.subr.bf16.mxu0 %v1296
    %1763 = vmatpush1.bf16.msra.mxu0 %v1295
    %1764 = vmatprep.subr.bf16.mxu0 %v1300
    %1765 = vmatpush1.bf16.msra.mxu0 %v1299
    %1766 = vmatprep.subr.bf16.mxu0 %v1304
    %1767 = vmatpush1.bf16.msra.mxu0 %v1303
    %1768 = vmatprep.subr.bf16.mxu0 %v1308
    %1769 = vmatpush1.bf16.msra.mxu0 %v1307
    %1770 = vmatprep.subr.bf16.mxu0 %v1312
    %1771 = vmatpush1.bf16.msra.mxu0 %v1311
    %1772 = vmatprep.mubr.bf16.mxu0 %v409
    %1773 = vmatmul.mubr.bf16.gmra.mrb[0].mxu0 %v407
    %v1774 = vpop.f32.mrb[0].mxu0
    %v1775 = vadd.f32 %v1734, %v1774
    %v1776 = vpop.f32.mrb[0].mxu0
    %v1777 = vadd.f32 %v1736, %v1776
    %v1778 = vpop.f32.mrb[0].mxu0
    %v1779 = vpop.f32.mrb[0].mxu0
    %1780 = vdwg.mxu0
    %1781 = vmatprep.subr.bf16.mxu0 %v1316
    %1782 = vmatpush1.bf16.msra.mxu0 %v1315
    %1783 = vmatprep.subr.bf16.mxu0 %v1320
    %1784 = vmatpush1.bf16.msra.mxu0 %v1319
    %1785 = vmatprep.subr.bf16.mxu0 %v1324
    %1786 = vmatpush1.bf16.msra.mxu0 %v1323
    %1787 = vmatprep.subr.bf16.mxu0 %v1328
    %1788 = vmatpush1.bf16.msra.mxu0 %v1327
    %1789 = vmatprep.subr.bf16.mxu0 %v1332
    %1790 = vmatpush1.bf16.msra.mxu0 %v1331
    %1791 = vmatprep.subr.bf16.mxu0 %v1336
    %1792 = vmatpush1.bf16.msra.mxu0 %v1335
    %1793 = vmatprep.subr.bf16.mxu0 %v1340
    %1794 = vmatpush1.bf16.msra.mxu0 %v1339
    %1795 = vmatprep.subr.bf16.mxu0 %v1344
    %1796 = vmatpush1.bf16.msra.mxu0 %v1343
    %1797 = vmatprep.subr.bf16.mxu0 %v1348
    %1798 = vmatpush1.bf16.msra.mxu0 %v1347
    %1799 = vmatprep.subr.bf16.mxu0 %v1352
    %1800 = vmatpush1.bf16.msra.mxu0 %v1351
    %1801 = vmatprep.subr.bf16.mxu0 %v1356
    %1802 = vmatpush1.bf16.msra.mxu0 %v1355
    %1803 = vmatprep.subr.bf16.mxu0 %v1360
    %1804 = vmatpush1.bf16.msra.mxu0 %v1359
    %1805 = vmatprep.subr.bf16.mxu0 %v1364
    %1806 = vmatpush1.bf16.msra.mxu0 %v1363
    %1807 = vmatprep.subr.bf16.mxu0 %v1368
    %1808 = vmatpush1.bf16.msra.mxu0 %v1367
    %1809 = vmatprep.subr.bf16.mxu0 %v1372
    %1810 = vmatpush1.bf16.msra.mxu0 %v1371
    %1811 = vmatprep.subr.bf16.mxu0 %v1376
    %1812 = vmatpush1.bf16.msra.mxu0 %v1375
    %1813 = vmatprep.mubr.bf16.mxu0 %v406
    %1814 = vmatmul.mubr.bf16.gmra.mrb[0].mxu0 %v392
    %v1815 = vpop.f32.mrb[0].mxu0
    %v1816 = vadd.f32 %v1775, %v1815
    %v1817 = vpop.f32.mrb[0].mxu0
    %v1818 = vadd.f32 %v1777, %v1817
    %v1819 = vpop.f32.mrb[0].mxu0
    %v1820 = vpop.f32.mrb[0].mxu0
    %1821 = vdwg.mxu0
    %1822 = vmatprep.subr.bf16.mxu0 %v1380
    %1823 = vmatpush1.bf16.msra.mxu0 %v1379
    %1824 = vmatprep.subr.bf16.mxu0 %v1384
    %1825 = vmatpush1.bf16.msra.mxu0 %v1383
    %1826 = vmatprep.subr.bf16.mxu0 %v1388
    %1827 = vmatpush1.bf16.msra.mxu0 %v1387
    %1828 = vmatprep.subr.bf16.mxu0 %v1392
    %1829 = vmatpush1.bf16.msra.mxu0 %v1391
    %1830 = vmatprep.subr.bf16.mxu0 %v1396
    %1831 = vmatpush1.bf16.msra.mxu0 %v1395
    %1832 = vmatprep.subr.bf16.mxu0 %v1400
    %1833 = vmatpush1.bf16.msra.mxu0 %v1399
    %1834 = vmatprep.subr.bf16.mxu0 %v1404
    %1835 = vmatpush1.bf16.msra.mxu0 %v1403
    %1836 = vmatprep.subr.bf16.mxu0 %v1408
    %1837 = vmatpush1.bf16.msra.mxu0 %v1407
    %1838 = vmatprep.subr.bf16.mxu0 %v1412
    %1839 = vmatpush1.bf16.msra.mxu0 %v1411
    %1840 = vmatprep.subr.bf16.mxu0 %v1416
    %1841 = vmatpush1.bf16.msra.mxu0 %v1415
    %1842 = vmatprep.subr.bf16.mxu0 %v1420
    %1843 = vmatpush1.bf16.msra.mxu0 %v1419
    %1844 = vmatprep.subr.bf16.mxu0 %v1424
    %1845 = vmatpush1.bf16.msra.mxu0 %v1423
    %1846 = vmatprep.subr.bf16.mxu0 %v1428
    %1847 = vmatpush1.bf16.msra.mxu0 %v1427
    %1848 = vmatprep.subr.bf16.mxu0 %v1432
    %1849 = vmatpush1.bf16.msra.mxu0 %v1431
    %1850 = vmatprep.subr.bf16.mxu0 %v1436
    %1851 = vmatpush1.bf16.msra.mxu0 %v1435
    %1852 = vmatprep.subr.bf16.mxu0 %v1440
    %1853 = vmatpush1.bf16.msra.mxu0 %v1439
    %1854 = vmatprep.mubr.bf16.mxu0 %v410
    %1855 = vmatmul.mubr.bf16.gmra.mrb[0].mxu0 %v408
    %v1856 = vpop.f32.mrb[0].mxu0
    %v1857 = vadd.f32 %v1816, %v1856
    %v1858 = vpop.f32.mrb[0].mxu0
    %v1859 = vadd.f32 %v1818, %v1858
    %v1860 = vpop.f32.mrb[0].mxu0
    %v1861 = vpop.f32.mrb[0].mxu0
    %1862 = vdwg.mxu0
    %1863 = vmatprep.subr.bf16.mxu0 %v1190
    %1864 = vmatpush1.bf16.msra.mxu0 %v1189
    %1865 = vmatprep.subr.bf16.mxu0 %v1194
    %1866 = vmatpush1.bf16.msra.mxu0 %v1193
    %1867 = vmatprep.subr.bf16.mxu0 %v1198
    %1868 = vmatpush1.bf16.msra.mxu0 %v1197
    %1869 = vmatprep.subr.bf16.mxu0 %v1202
    %1870 = vmatpush1.bf16.msra.mxu0 %v1201
    %1871 = vmatprep.subr.bf16.mxu0 %v1206
    %1872 = vmatpush1.bf16.msra.mxu0 %v1205
    %1873 = vmatprep.subr.bf16.mxu0 %v1210
    %1874 = vmatpush1.bf16.msra.mxu0 %v1209
    %1875 = vmatprep.subr.bf16.mxu0 %v1214
    %1876 = vmatpush1.bf16.msra.mxu0 %v1213
    %1877 = vmatprep.subr.bf16.mxu0 %v1218
    %1878 = vmatpush1.bf16.msra.mxu0 %v1217
    %1879 = vmatprep.subr.bf16.mxu0 %v1222
    %1880 = vmatpush1.bf16.msra.mxu0 %v1221
    %1881 = vmatprep.subr.bf16.mxu0 %v1226
    %1882 = vmatpush1.bf16.msra.mxu0 %v1225
    %1883 = vmatprep.subr.bf16.mxu0 %v1230
    %1884 = vmatpush1.bf16.msra.mxu0 %v1229
    %1885 = vmatprep.subr.bf16.mxu0 %v1234
    %1886 = vmatpush1.bf16.msra.mxu0 %v1233
    %1887 = vmatprep.subr.bf16.mxu0 %v1238
    %1888 = vmatpush1.bf16.msra.mxu0 %v1237
    %1889 = vmatprep.subr.bf16.mxu0 %v1242
    %1890 = vmatpush1.bf16.msra.mxu0 %v1241
    %1891 = vmatprep.subr.bf16.mxu0 %v1246
    %1892 = vmatpush1.bf16.msra.mxu0 %v1245
    %1893 = vmatprep.subr.bf16.mxu0 %v1250
    %1894 = vmatpush1.bf16.msra.mxu0 %v1249
    %1895 = vmatprep.mubr.bf16.mxu0 %v399
    %1896 = vmatmul.mubr.bf16.gmra.mrb[0].mxu0 %v385
    %v1897 = vpop.f32.mrb[0].mxu0
    %v1898 = vadd.f32 %v352, %v1897
    %v1899 = vpop.f32.mrb[0].mxu0
    %v1900 = vadd.f32 %v356, %v1899
    %v1901 = vpop.f32.mrb[0].mxu0
    %v1902 = vpop.f32.mrb[0].mxu0
    %1903 = vdwg.mxu0
    %1904 = vmatprep.subr.bf16.mxu0 %v1254
    %1905 = vmatpush1.bf16.msra.mxu0 %v1253
    %1906 = vmatprep.subr.bf16.mxu0 %v1258
    %1907 = vmatpush1.bf16.msra.mxu0 %v1257
    %1908 = vmatprep.subr.bf16.mxu0 %v1262
    %1909 = vmatpush1.bf16.msra.mxu0 %v1261
    %1910 = vmatprep.subr.bf16.mxu0 %v1266
    %1911 = vmatpush1.bf16.msra.mxu0 %v1265
    %1912 = vmatprep.subr.bf16.mxu0 %v1270
    %1913 = vmatpush1.bf16.msra.mxu0 %v1269
    %1914 = vmatprep.subr.bf16.mxu0 %v1274
    %1915 = vmatpush1.bf16.msra.mxu0 %v1273
    %1916 = vmatprep.subr.bf16.mxu0 %v1278
    %1917 = vmatpush1.bf16.msra.mxu0 %v1277
    %1918 = vmatprep.subr.bf16.mxu0 %v1282
    %1919 = vmatpush1.bf16.msra.mxu0 %v1281
    %1920 = vmatprep.subr.bf16.mxu0 %v1286
    %1921 = vmatpush1.bf16.msra.mxu0 %v1285
    %1922 = vmatprep.subr.bf16.mxu0 %v1290
    %1923 = vmatpush1.bf16.msra.mxu0 %v1289
    %1924 = vmatprep.subr.bf16.mxu0 %v1294
    %1925 = vmatpush1.bf16.msra.mxu0 %v1293
    %1926 = vmatprep.subr.bf16.mxu0 %v1298
    %1927 = vmatpush1.bf16.msra.mxu0 %v1297
    %1928 = vmatprep.subr.bf16.mxu0 %v1302
    %1929 = vmatpush1.bf16.msra.mxu0 %v1301
    %1930 = vmatprep.subr.bf16.mxu0 %v1306
    %1931 = vmatpush1.bf16.msra.mxu0 %v1305
    %1932 = vmatprep.subr.bf16.mxu0 %v1310
    %1933 = vmatpush1.bf16.msra.mxu0 %v1309
    %1934 = vmatprep.subr.bf16.mxu0 %v1314
    %1935 = vmatpush1.bf16.msra.mxu0 %v1313
    %1936 = vmatprep.mubr.bf16.mxu0 %v409
    %1937 = vmatmul.mubr.bf16.gmra.mrb[0].mxu0 %v407
    %v1938 = vpop.f32.mrb[0].mxu0
    %v1939 = vadd.f32 %v1898, %v1938
    %v1940 = vpop.f32.mrb[0].mxu0
    %v1941 = vadd.f32 %v1900, %v1940
    %v1942 = vpop.f32.mrb[0].mxu0
    %v1943 = vpop.f32.mrb[0].mxu0
    %1944 = vdwg.mxu0
    %1945 = vmatprep.subr.bf16.mxu0 %v1318
    %1946 = vmatpush1.bf16.msra.mxu0 %v1317
    %1947 = vmatprep.subr.bf16.mxu0 %v1322
    %1948 = vmatpush1.bf16.msra.mxu0 %v1321
    %1949 = vmatprep.subr.bf16.mxu0 %v1326
    %1950 = vmatpush1.bf16.msra.mxu0 %v1325
    %1951 = vmatprep.subr.bf16.mxu0 %v1330
    %1952 = vmatpush1.bf16.msra.mxu0 %v1329
    %1953 = vmatprep.subr.bf16.mxu0 %v1334
    %1954 = vmatpush1.bf16.msra.mxu0 %v1333
    %1955 = vmatprep.subr.bf16.mxu0 %v1338
    %1956 = vmatpush1.bf16.msra.mxu0 %v1337
    %1957 = vmatprep.subr.bf16.mxu0 %v1342
    %1958 = vmatpush1.bf16.msra.mxu0 %v1341
    %1959 = vmatprep.subr.bf16.mxu0 %v1346
    %1960 = vmatpush1.bf16.msra.mxu0 %v1345
    %1961 = vmatprep.subr.bf16.mxu0 %v1350
    %1962 = vmatpush1.bf16.msra.mxu0 %v1349
    %1963 = vmatprep.subr.bf16.mxu0 %v1354
    %1964 = vmatpush1.bf16.msra.mxu0 %v1353
    %1965 = vmatprep.subr.bf16.mxu0 %v1358
    %1966 = vmatpush1.bf16.msra.mxu0 %v1357
    %1967 = vmatprep.subr.bf16.mxu0 %v1362
    %1968 = vmatpush1.bf16.msra.mxu0 %v1361
    %1969 = vmatprep.subr.bf16.mxu0 %v1366
    %1970 = vmatpush1.bf16.msra.mxu0 %v1365
    %1971 = vmatprep.subr.bf16.mxu0 %v1370
    %1972 = vmatpush1.bf16.msra.mxu0 %v1369
    %1973 = vmatprep.subr.bf16.mxu0 %v1374
    %1974 = vmatpush1.bf16.msra.mxu0 %v1373
    %1975 = vmatprep.subr.bf16.mxu0 %v1378
    %1976 = vmatpush1.bf16.msra.mxu0 %v1377
    %1977 = vmatprep.mubr.bf16.mxu0 %v406
    %1978 = vmatmul.mubr.bf16.gmra.mrb[0].mxu0 %v392
    %v1979 = vpop.f32.mrb[0].mxu0
    %v1980 = vadd.f32 %v1939, %v1979
    %v1981 = vpop.f32.mrb[0].mxu0
    %v1982 = vadd.f32 %v1941, %v1981
    %v1983 = vpop.f32.mrb[0].mxu0
    %v1984 = vpop.f32.mrb[0].mxu0
    %1985 = vdwg.mxu0
    %1986 = vmatprep.subr.bf16.mxu0 %v1382
    %1987 = vmatpush1.bf16.msra.mxu0 %v1381
    %1988 = vmatprep.subr.bf16.mxu0 %v1386
    %1989 = vmatpush1.bf16.msra.mxu0 %v1385
    %1990 = vmatprep.subr.bf16.mxu0 %v1390
    %1991 = vmatpush1.bf16.msra.mxu0 %v1389
    %1992 = vmatprep.subr.bf16.mxu0 %v1394
    %1993 = vmatpush1.bf16.msra.mxu0 %v1393
    %1994 = vmatprep.subr.bf16.mxu0 %v1398
    %1995 = vmatpush1.bf16.msra.mxu0 %v1397
    %1996 = vmatprep.subr.bf16.mxu0 %v1402
    %1997 = vmatpush1.bf16.msra.mxu0 %v1401
    %1998 = vmatprep.subr.bf16.mxu0 %v1406
    %1999 = vmatpush1.bf16.msra.mxu0 %v1405
    %2000 = vmatprep.subr.bf16.mxu0 %v1410
    %2001 = vmatpush1.bf16.msra.mxu0 %v1409
    %2002 = vmatprep.subr.bf16.mxu0 %v1414
    %2003 = vmatpush1.bf16.msra.mxu0 %v1413
    %2004 = vmatprep.subr.bf16.mxu0 %v1418
    %2005 = vmatpush1.bf16.msra.mxu0 %v1417
    %2006 = vmatprep.subr.bf16.mxu0 %v1422
    %2007 = vmatpush1.bf16.msra.mxu0 %v1421
    %2008 = vmatprep.subr.bf16.mxu0 %v1426
    %2009 = vmatpush1.bf16.msra.mxu0 %v1425
    %2010 = vmatprep.subr.bf16.mxu0 %v1430
    %2011 = vmatpush1.bf16.msra.mxu0 %v1429
    %2012 = vmatprep.subr.bf16.mxu0 %v1434
    %2013 = vmatpush1.bf16.msra.mxu0 %v1433
    %2014 = vmatprep.subr.bf16.mxu0 %v1438
    %2015 = vmatpush1.bf16.msra.mxu0 %v1437
    %2016 = vmatprep.subr.bf16.mxu0 %v1442
    %2017 = vmatpush1.bf16.msra.mxu0 %v1441
    %2018 = vmatprep.mubr.bf16.mxu0 %v410
    %2019 = vmatmul.mubr.bf16.gmra.mrb[0].mxu0 %v408
    %v2020 = vpop.f32.mrb[0].mxu0
    %v2021 = vadd.f32 %v1980, %v2020
    %v2022 = vpop.f32.mrb[0].mxu0
    %v2023 = vadd.f32 %v1982, %v2022
    %v2024 = vpop.f32.mrb[0].mxu0
    %v2025 = vpop.f32.mrb[0].mxu0
    %2026 = vdwg.mxu0
    %v2027 = vmax.f32 %v1857, 0.0
    %v2028 = vmax.f32 %v1859, 0.0
    %v2029 = vmax.f32 %v2021, 0.0
    %v2030 = vmax.f32 %v2023, 0.0
    %v2031 = vpack.c.bf16 %v2027, %v2027
    %v2032 = vpack.c.bf16 %v2028, %v2028
    %v2033 = vpack.c.bf16 %v2029, %v2029
    %v2034 = vpack.c.bf16 %v2030, %v2030
    %v2035 = vld [vmem:[#allocation4] sm:$0xff]
    %v2036 = vld [vmem:[#allocation4 + $0x8] sm:$0xff]
    %v2037 = vld [vmem:[#allocation4 + $0x10] sm:$0xff]
    %v2038 = vld [vmem:[#allocation4 + $0x18] sm:$0xff]
    %v2039 = vld [vmem:[#allocation4 + $0x20] sm:$0xff]
    %v2040 = vld [vmem:[#allocation4 + $0x28] sm:$0xff]
    %v2041 = vld [vmem:[#allocation4 + $0x30] sm:$0xff]
    %v2042 = vld [vmem:[#allocation4 + $0x38] sm:$0xff]
    %v2043 = vld [vmem:[#allocation4 + $0x40] sm:$0xff]
    %v2044 = vld [vmem:[#allocation4 + $0x48] sm:$0xff]
    %v2045 = vld [vmem:[#allocation4 + $0x50] sm:$0xff]
    %v2046 = vld [vmem:[#allocation4 + $0x58] sm:$0xff]
    %v2047 = vld [vmem:[#allocation4 + $0x60] sm:$0xff]
    %v2048 = vld [vmem:[#allocation4 + $0x68] sm:$0xff]
    %v2049 = vld [vmem:[#allocation4 + $0x70] sm:$0xff]
    %v2050 = vld [vmem:[#allocation4 + $0x78] sm:$0xff]
    %v2051 = vld [vmem:[#allocation4 + $0x80] sm:$0xff]
    %v2052 = vld [vmem:[#allocation4 + $0x88] sm:$0xff]
    %v2053 = vld [vmem:[#allocation4 + $0x90] sm:$0xff]
    %v2054 = vld [vmem:[#allocation4 + $0x98] sm:$0xff]
    %v2055 = vld [vmem:[#allocation4 + $0xa0] sm:$0xff]
    %v2056 = vld [vmem:[#allocation4 + $0xa8] sm:$0xff]
    %v2057 = vld [vmem:[#allocation4 + $0xb0] sm:$0xff]
    %v2058 = vld [vmem:[#allocation4 + $0xb8] sm:$0xff]
    %v2059 = vld [vmem:[#allocation4 + $0xc0] sm:$0xff]
    %v2060 = vld [vmem:[#allocation4 + $0xc8] sm:$0xff]
    %v2061 = vld [vmem:[#allocation4 + $0xd0] sm:$0xff]
    %v2062 = vld [vmem:[#allocation4 + $0xd8] sm:$0xff]
    %v2063 = vld [vmem:[#allocation4 + $0xe0] sm:$0xff]
    %v2064 = vld [vmem:[#allocation4 + $0xe8] sm:$0xff]
    %v2065 = vld [vmem:[#allocation4 + $0xf0] sm:$0xff]
    %v2066 = vld [vmem:[#allocation4 + $0xf8] sm:$0xff]
    %v2067 = vld [vmem:[#allocation4 + $0x100] sm:$0xff]
    %v2068 = vld [vmem:[#allocation4 + $0x108] sm:$0xff]
    %v2069 = vld [vmem:[#allocation4 + $0x110] sm:$0xff]
    %v2070 = vld [vmem:[#allocation4 + $0x118] sm:$0xff]
    %v2071 = vld [vmem:[#allocation4 + $0x120] sm:$0xff]
    %v2072 = vld [vmem:[#allocation4 + $0x128] sm:$0xff]
    %v2073 = vld [vmem:[#allocation4 + $0x130] sm:$0xff]
    %v2074 = vld [vmem:[#allocation4 + $0x138] sm:$0xff]
    %v2075 = vld [vmem:[#allocation4 + $0x140] sm:$0xff]
    %v2076 = vld [vmem:[#allocation4 + $0x148] sm:$0xff]
    %v2077 = vld [vmem:[#allocation4 + $0x150] sm:$0xff]
    %v2078 = vld [vmem:[#allocation4 + $0x158] sm:$0xff]
    %v2079 = vld [vmem:[#allocation4 + $0x160] sm:$0xff]
    %v2080 = vld [vmem:[#allocation4 + $0x168] sm:$0xff]
    %v2081 = vld [vmem:[#allocation4 + $0x170] sm:$0xff]
    %v2082 = vld [vmem:[#allocation4 + $0x178] sm:$0xff]
    %v2083 = vld [vmem:[#allocation4 + $0x180] sm:$0xff]
    %v2084 = vld [vmem:[#allocation4 + $0x188] sm:$0xff]
    %v2085 = vld [vmem:[#allocation4 + $0x190] sm:$0xff]
    %v2086 = vld [vmem:[#allocation4 + $0x198] sm:$0xff]
    %v2087 = vld [vmem:[#allocation4 + $0x1a0] sm:$0xff]
    %v2088 = vld [vmem:[#allocation4 + $0x1a8] sm:$0xff]
    %v2089 = vld [vmem:[#allocation4 + $0x1b0] sm:$0xff]
    %v2090 = vld [vmem:[#allocation4 + $0x1b8] sm:$0xff]
    %v2091 = vld [vmem:[#allocation4 + $0x1c0] sm:$0xff]
    %v2092 = vld [vmem:[#allocation4 + $0x1c8] sm:$0xff]
    %v2093 = vld [vmem:[#allocation4 + $0x1d0] sm:$0xff]
    %v2094 = vld [vmem:[#allocation4 + $0x1d8] sm:$0xff]
    %v2095 = vld [vmem:[#allocation4 + $0x1e0] sm:$0xff]
    %v2096 = vld [vmem:[#allocation4 + $0x1e8] sm:$0xff]
    %v2097 = vld [vmem:[#allocation4 + $0x1f0] sm:$0xff]
    %v2098 = vld [vmem:[#allocation4 + $0x1f8] sm:$0xff]
    %v2099 = vld [vmem:[%s6 + $0x4] sm:$0x3]
    %v2101 = vlaneseq
    %v2102 = vshrl.u32 %v2101, 7
    %v2103 = vsub.s32 0, %v2102
    %v2104 = vrot.slane %v2099, %v2103
    %v2105 = vlaneseq
    %v2106 = vshrl.u32 %v2105, 7
    %v2107 = vsub.s32 1, %v2106
    %v2108 = vrot.slane %v2099, %v2107
    %v2175 = vunpack.c.l.b16 %v2035
    %v2176 = vunpack.c.h.b16 %v2035
    %v2177 = vunpack.c.l.b16 %v2036
    %v2178 = vunpack.c.h.b16 %v2036
    %v2179 = vunpack.c.l.b16 %v2037
    %v2180 = vunpack.c.h.b16 %v2037
    %v2181 = vunpack.c.l.b16 %v2038
    %v2182 = vunpack.c.h.b16 %v2038
    %v2183 = vunpack.c.l.b16 %v2039
    %v2184 = vunpack.c.h.b16 %v2039
    %v2185 = vunpack.c.l.b16 %v2040
    %v2186 = vunpack.c.h.b16 %v2040
    %v2187 = vunpack.c.l.b16 %v2041
    %v2188 = vunpack.c.h.b16 %v2041
    %v2189 = vunpack.c.l.b16 %v2042
    %v2190 = vunpack.c.h.b16 %v2042
    %v2191 = vunpack.c.l.b16 %v2043
    %v2192 = vunpack.c.h.b16 %v2043
    %v2193 = vunpack.c.l.b16 %v2044
    %v2194 = vunpack.c.h.b16 %v2044
    %v2195 = vunpack.c.l.b16 %v2045
    %v2196 = vunpack.c.h.b16 %v2045
    %v2197 = vunpack.c.l.b16 %v2046
    %v2198 = vunpack.c.h.b16 %v2046
    %v2199 = vunpack.c.l.b16 %v2047
    %v2200 = vunpack.c.h.b16 %v2047
    %v2201 = vunpack.c.l.b16 %v2048
    %v2202 = vunpack.c.h.b16 %v2048
    %v2203 = vunpack.c.l.b16 %v2049
    %v2204 = vunpack.c.h.b16 %v2049
    %v2205 = vunpack.c.l.b16 %v2050
    %v2206 = vunpack.c.h.b16 %v2050
    %v2207 = vunpack.c.l.b16 %v2051
    %v2208 = vunpack.c.h.b16 %v2051
    %v2209 = vunpack.c.l.b16 %v2052
    %v2210 = vunpack.c.h.b16 %v2052
    %v2211 = vunpack.c.l.b16 %v2053
    %v2212 = vunpack.c.h.b16 %v2053
    %v2213 = vunpack.c.l.b16 %v2054
    %v2214 = vunpack.c.h.b16 %v2054
    %v2215 = vunpack.c.l.b16 %v2055
    %v2216 = vunpack.c.h.b16 %v2055
    %v2217 = vunpack.c.l.b16 %v2056
    %v2218 = vunpack.c.h.b16 %v2056
    %v2219 = vunpack.c.l.b16 %v2057
    %v2220 = vunpack.c.h.b16 %v2057
    %v2221 = vunpack.c.l.b16 %v2058
    %v2222 = vunpack.c.h.b16 %v2058
    %v2223 = vunpack.c.l.b16 %v2059
    %v2224 = vunpack.c.h.b16 %v2059
    %v2225 = vunpack.c.l.b16 %v2060
    %v2226 = vunpack.c.h.b16 %v2060
    %v2227 = vunpack.c.l.b16 %v2061
    %v2228 = vunpack.c.h.b16 %v2061
    %v2229 = vunpack.c.l.b16 %v2062
    %v2230 = vunpack.c.h.b16 %v2062
    %v2231 = vunpack.c.l.b16 %v2063
    %v2232 = vunpack.c.h.b16 %v2063
    %v2233 = vunpack.c.l.b16 %v2064
    %v2234 = vunpack.c.h.b16 %v2064
    %v2235 = vunpack.c.l.b16 %v2065
    %v2236 = vunpack.c.h.b16 %v2065
    %v2237 = vunpack.c.l.b16 %v2066
    %v2238 = vunpack.c.h.b16 %v2066
    %v2239 = vunpack.c.l.b16 %v2067
    %v2240 = vunpack.c.h.b16 %v2067
    %v2241 = vunpack.c.l.b16 %v2068
    %v2242 = vunpack.c.h.b16 %v2068
    %v2243 = vunpack.c.l.b16 %v2069
    %v2244 = vunpack.c.h.b16 %v2069
    %v2245 = vunpack.c.l.b16 %v2070
    %v2246 = vunpack.c.h.b16 %v2070
    %v2247 = vunpack.c.l.b16 %v2071
    %v2248 = vunpack.c.h.b16 %v2071
    %v2249 = vunpack.c.l.b16 %v2072
    %v2250 = vunpack.c.h.b16 %v2072
    %v2251 = vunpack.c.l.b16 %v2073
    %v2252 = vunpack.c.h.b16 %v2073
    %v2253 = vunpack.c.l.b16 %v2074
    %v2254 = vunpack.c.h.b16 %v2074
    %v2255 = vunpack.c.l.b16 %v2075
    %v2256 = vunpack.c.h.b16 %v2075
    %v2257 = vunpack.c.l.b16 %v2076
    %v2258 = vunpack.c.h.b16 %v2076
    %v2259 = vunpack.c.l.b16 %v2077
    %v2260 = vunpack.c.h.b16 %v2077
    %v2261 = vunpack.c.l.b16 %v2078
    %v2262 = vunpack.c.h.b16 %v2078
    %v2263 = vunpack.c.l.b16 %v2079
    %v2264 = vunpack.c.h.b16 %v2079
    %v2265 = vunpack.c.l.b16 %v2080
    %v2266 = vunpack.c.h.b16 %v2080
    %v2267 = vunpack.c.l.b16 %v2081
    %v2268 = vunpack.c.h.b16 %v2081
    %v2269 = vunpack.c.l.b16 %v2082
    %v2270 = vunpack.c.h.b16 %v2082
    %v2271 = vunpack.c.l.b16 %v2083
    %v2272 = vunpack.c.h.b16 %v2083
    %v2273 = vunpack.c.l.b16 %v2084
    %v2274 = vunpack.c.h.b16 %v2084
    %v2275 = vunpack.c.l.b16 %v2085
    %v2276 = vunpack.c.h.b16 %v2085
    %v2277 = vunpack.c.l.b16 %v2086
    %v2278 = vunpack.c.h.b16 %v2086
    %v2279 = vunpack.c.l.b16 %v2087
    %v2280 = vunpack.c.h.b16 %v2087
    %v2281 = vunpack.c.l.b16 %v2088
    %v2282 = vunpack.c.h.b16 %v2088
    %v2283 = vunpack.c.l.b16 %v2089
    %v2284 = vunpack.c.h.b16 %v2089
    %v2285 = vunpack.c.l.b16 %v2090
    %v2286 = vunpack.c.h.b16 %v2090
    %v2287 = vunpack.c.l.b16 %v2091
    %v2288 = vunpack.c.h.b16 %v2091
    %v2289 = vunpack.c.l.b16 %v2092
    %v2290 = vunpack.c.h.b16 %v2092
    %v2291 = vunpack.c.l.b16 %v2093
    %v2292 = vunpack.c.h.b16 %v2093
    %v2293 = vunpack.c.l.b16 %v2094
    %v2294 = vunpack.c.h.b16 %v2094
    %v2295 = vunpack.c.l.b16 %v2095
    %v2296 = vunpack.c.h.b16 %v2095
    %v2297 = vunpack.c.l.b16 %v2096
    %v2298 = vunpack.c.h.b16 %v2096
    %v2299 = vunpack.c.l.b16 %v2097
    %v2300 = vunpack.c.h.b16 %v2097
    %v2301 = vunpack.c.l.b16 %v2098
    %v2302 = vunpack.c.h.b16 %v2098
    %v2303 = vpack.c.b16 %v2177, %v2175
    %v2304 = vpack.c.b16 %v2178, %v2176
    %v2305 = vpack.c.b16 %v2181, %v2179
    %v2306 = vpack.c.b16 %v2182, %v2180
    %v2307 = vpack.c.b16 %v2185, %v2183
    %v2308 = vpack.c.b16 %v2186, %v2184
    %v2309 = vpack.c.b16 %v2189, %v2187
    %v2310 = vpack.c.b16 %v2190, %v2188
    %v2311 = vpack.c.b16 %v2193, %v2191
    %v2312 = vpack.c.b16 %v2194, %v2192
    %v2313 = vpack.c.b16 %v2197, %v2195
    %v2314 = vpack.c.b16 %v2198, %v2196
    %v2315 = vpack.c.b16 %v2201, %v2199
    %v2316 = vpack.c.b16 %v2202, %v2200
    %v2317 = vpack.c.b16 %v2205, %v2203
    %v2318 = vpack.c.b16 %v2206, %v2204
    %v2319 = vpack.c.b16 %v2209, %v2207
    %v2320 = vpack.c.b16 %v2210, %v2208
    %v2321 = vpack.c.b16 %v2213, %v2211
    %v2322 = vpack.c.b16 %v2214, %v2212
    %v2323 = vpack.c.b16 %v2217, %v2215
    %v2324 = vpack.c.b16 %v2218, %v2216
    %v2325 = vpack.c.b16 %v2221, %v2219
    %v2326 = vpack.c.b16 %v2222, %v2220
    %v2327 = vpack.c.b16 %v2225, %v2223
    %v2328 = vpack.c.b16 %v2226, %v2224
    %v2329 = vpack.c.b16 %v2229, %v2227
    %v2330 = vpack.c.b16 %v2230, %v2228
    %v2331 = vpack.c.b16 %v2233, %v2231
    %v2332 = vpack.c.b16 %v2234, %v2232
    %v2333 = vpack.c.b16 %v2237, %v2235
    %v2334 = vpack.c.b16 %v2238, %v2236
    %v2335 = vpack.c.b16 %v2241, %v2239
    %v2336 = vpack.c.b16 %v2242, %v2240
    %v2337 = vpack.c.b16 %v2245, %v2243
    %v2338 = vpack.c.b16 %v2246, %v2244
    %v2339 = vpack.c.b16 %v2249, %v2247
    %v2340 = vpack.c.b16 %v2250, %v2248
    %v2341 = vpack.c.b16 %v2253, %v2251
    %v2342 = vpack.c.b16 %v2254, %v2252
    %v2343 = vpack.c.b16 %v2257, %v2255
    %v2344 = vpack.c.b16 %v2258, %v2256
    %v2345 = vpack.c.b16 %v2261, %v2259
    %v2346 = vpack.c.b16 %v2262, %v2260
    %v2347 = vpack.c.b16 %v2265, %v2263
    %v2348 = vpack.c.b16 %v2266, %v2264
    %v2349 = vpack.c.b16 %v2269, %v2267
    %v2350 = vpack.c.b16 %v2270, %v2268
    %v2351 = vpack.c.b16 %v2273, %v2271
    %v2352 = vpack.c.b16 %v2274, %v2272
    %v2353 = vpack.c.b16 %v2277, %v2275
    %v2354 = vpack.c.b16 %v2278, %v2276
    %v2355 = vpack.c.b16 %v2281, %v2279
    %v2356 = vpack.c.b16 %v2282, %v2280
    %v2357 = vpack.c.b16 %v2285, %v2283
    %v2358 = vpack.c.b16 %v2286, %v2284
    %v2359 = vpack.c.b16 %v2289, %v2287
    %v2360 = vpack.c.b16 %v2290, %v2288
    %v2361 = vpack.c.b16 %v2293, %v2291
    %v2362 = vpack.c.b16 %v2294, %v2292
    %v2363 = vpack.c.b16 %v2297, %v2295
    %v2364 = vpack.c.b16 %v2298, %v2296
    %v2365 = vpack.c.b16 %v2301, %v2299
    %v2366 = vpack.c.b16 %v2302, %v2300
    %2431 = vmatprep.subr.bf16.mxu0 %v2304
    %2432 = vmatpush1.bf16.msra.mxu0 %v2303
    %2433 = vmatprep.subr.bf16.mxu0 %v2306
    %2434 = vmatpush1.bf16.msra.mxu0 %v2305
    %2435 = vmatprep.subr.bf16.mxu0 %v2308
    %2436 = vmatpush1.bf16.msra.mxu0 %v2307
    %2437 = vmatprep.subr.bf16.mxu0 %v2310
    %2438 = vmatpush1.bf16.msra.mxu0 %v2309
    %2439 = vmatprep.subr.bf16.mxu0 %v2312
    %2440 = vmatpush1.bf16.msra.mxu0 %v2311
    %2441 = vmatprep.subr.bf16.mxu0 %v2314
    %2442 = vmatpush1.bf16.msra.mxu0 %v2313
    %2443 = vmatprep.subr.bf16.mxu0 %v2316
    %2444 = vmatpush1.bf16.msra.mxu0 %v2315
    %2445 = vmatprep.subr.bf16.mxu0 %v2318
    %2446 = vmatpush1.bf16.msra.mxu0 %v2317
    %2447 = vmatprep.subr.bf16.mxu0 %v2320
    %2448 = vmatpush1.bf16.msra.mxu0 %v2319
    %2449 = vmatprep.subr.bf16.mxu0 %v2322
    %2450 = vmatpush1.bf16.msra.mxu0 %v2321
    %2451 = vmatprep.subr.bf16.mxu0 %v2324
    %2452 = vmatpush1.bf16.msra.mxu0 %v2323
    %2453 = vmatprep.subr.bf16.mxu0 %v2326
    %2454 = vmatpush1.bf16.msra.mxu0 %v2325
    %2455 = vmatprep.subr.bf16.mxu0 %v2328
    %2456 = vmatpush1.bf16.msra.mxu0 %v2327
    %2457 = vmatprep.subr.bf16.mxu0 %v2330
    %2458 = vmatpush1.bf16.msra.mxu0 %v2329
    %2459 = vmatprep.subr.bf16.mxu0 %v2332
    %2460 = vmatpush1.bf16.msra.mxu0 %v2331
    %2461 = vmatprep.subr.bf16.mxu0 %v2334
    %2462 = vmatpush1.bf16.msra.mxu0 %v2333
    %2463 = vmatprep.mubr.bf16.mxu0 %v2032
    %2464 = vmatmul.mubr.bf16.gmra.mrb[0].mxu0 %v2031
    %v2465 = vpop.f32.mrb[0].mxu0
    %v2466 = vadd.f32 %v2104, %v2465
    %v2467 = vpop.f32.mrb[0].mxu0
    %v2468 = vadd.f32 %v2108, %v2467
    %v2469 = vpop.f32.mrb[0].mxu0
    %v2470 = vpop.f32.mrb[0].mxu0
    %2471 = vdwg.mxu0
    %2472 = vmatprep.subr.bf16.mxu0 %v2336
    %2473 = vmatpush1.bf16.msra.mxu0 %v2335
    %2474 = vmatprep.subr.bf16.mxu0 %v2338
    %2475 = vmatpush1.bf16.msra.mxu0 %v2337
    %2476 = vmatprep.subr.bf16.mxu0 %v2340
    %2477 = vmatpush1.bf16.msra.mxu0 %v2339
    %2478 = vmatprep.subr.bf16.mxu0 %v2342
    %2479 = vmatpush1.bf16.msra.mxu0 %v2341
    %2480 = vmatprep.subr.bf16.mxu0 %v2344
    %2481 = vmatpush1.bf16.msra.mxu0 %v2343
    %2482 = vmatprep.subr.bf16.mxu0 %v2346
    %2483 = vmatpush1.bf16.msra.mxu0 %v2345
    %2484 = vmatprep.subr.bf16.mxu0 %v2348
    %2485 = vmatpush1.bf16.msra.mxu0 %v2347
    %2486 = vmatprep.subr.bf16.mxu0 %v2350
    %2487 = vmatpush1.bf16.msra.mxu0 %v2349
    %2488 = vmatprep.subr.bf16.mxu0 %v2352
    %2489 = vmatpush1.bf16.msra.mxu0 %v2351
    %2490 = vmatprep.subr.bf16.mxu0 %v2354
    %2491 = vmatpush1.bf16.msra.mxu0 %v2353
    %2492 = vmatprep.subr.bf16.mxu0 %v2356
    %2493 = vmatpush1.bf16.msra.mxu0 %v2355
    %2494 = vmatprep.subr.bf16.mxu0 %v2358
    %2495 = vmatpush1.bf16.msra.mxu0 %v2357
    %2496 = vmatprep.subr.bf16.mxu0 %v2360
    %2497 = vmatpush1.bf16.msra.mxu0 %v2359
    %2498 = vmatprep.subr.bf16.mxu0 %v2362
    %2499 = vmatpush1.bf16.msra.mxu0 %v2361
    %2500 = vmatprep.subr.bf16.mxu0 %v2364
    %2501 = vmatpush1.bf16.msra.mxu0 %v2363
    %2502 = vmatprep.subr.bf16.mxu0 %v2366
    %2503 = vmatpush1.bf16.msra.mxu0 %v2365
    %2504 = vmatprep.mubr.bf16.mxu0 %v2034
    %2505 = vmatmul.mubr.bf16.gmra.mrb[0].mxu0 %v2033
    %v2506 = vpop.f32.mrb[0].mxu0
    %v2507 = vadd.f32 %v2466, %v2506
    %v2508 = vpop.f32.mrb[0].mxu0
    %v2509 = vadd.f32 %v2468, %v2508
    %v2510 = vpop.f32.mrb[0].mxu0
    %v2511 = vpop.f32.mrb[0].mxu0
    %2512 = vdwg.mxu0
    %v2513 = vmax.f32 %v2507, 0.0
    %v2514 = vmax.f32 %v2509, 0.0
    %v2515 = vpack.c.bf16 %v2513, %v2513
    %v2516 = vpack.c.bf16 %v2514, %v2514
    %v2517 = vld [vmem:[%s3] sm:$0xf]
    %v2518 = vld [vmem:[%s3 + $0x4] sm:$0xf]
    %v2519 = vld [vmem:[%s3 + $0x8] sm:$0xf]
    %v2520 = vld [vmem:[%s3 + $0xc] sm:$0xf]
    %v2521 = vld [vmem:[%s3 + $0x10] sm:$0xf]
    %v2522 = vld [vmem:[%s3 + $0x14] sm:$0xf]
    %v2523 = vld [vmem:[%s3 + $0x18] sm:$0xf]
    %v2524 = vld [vmem:[%s3 + $0x1c] sm:$0xf]
    %v2525 = vld [vmem:[%s3 + $0x20] sm:$0xf]
    %v2526 = vld [vmem:[%s3 + $0x24] sm:$0xf]
    %v2527 = vld [vmem:[%s3 + $0x28] sm:$0xf]
    %v2528 = vld [vmem:[%s3 + $0x2c] sm:$0xf]
    %v2529 = vld [vmem:[%s3 + $0x30] sm:$0xf]
    %v2530 = vld [vmem:[%s3 + $0x34] sm:$0xf]
    %v2531 = vld [vmem:[%s3 + $0x38] sm:$0xf]
    %v2532 = vld [vmem:[%s3 + $0x3c] sm:$0xf]
    %v2533 = vld [vmem:[%s3 + $0x40] sm:$0xf]
    %v2534 = vld [vmem:[%s3 + $0x44] sm:$0xf]
    %v2535 = vld [vmem:[%s3 + $0x48] sm:$0xf]
    %v2536 = vld [vmem:[%s3 + $0x4c] sm:$0xf]
    %v2537 = vld [vmem:[%s3 + $0x50] sm:$0xf]
    %v2538 = vld [vmem:[%s3 + $0x54] sm:$0xf]
    %v2539 = vld [vmem:[%s3 + $0x58] sm:$0xf]
    %v2540 = vld [vmem:[%s3 + $0x5c] sm:$0xf]
    %v2541 = vld [vmem:[%s3 + $0x60] sm:$0xf]
    %v2542 = vld [vmem:[%s3 + $0x64] sm:$0xf]
    %v2543 = vld [vmem:[%s3 + $0x68] sm:$0xf]
    %v2544 = vld [vmem:[%s3 + $0x6c] sm:$0xf]
    %v2545 = vld [vmem:[%s3 + $0x70] sm:$0xf]
    %v2546 = vld [vmem:[%s3 + $0x74] sm:$0xf]
    %v2547 = vld [vmem:[%s3 + $0x78] sm:$0xf]
    %v2548 = vld [vmem:[%s3 + $0x7c] sm:$0xf]
    %v2549 = vld [vmem:[%s6 + $0x6] sm:$0x1]
    %v2551 = vlaneseq
    %v2552 = vshrl.u32 %v2551, 7
    %v2553 = vsub.s32 0, %v2552
    %v2554 = vrot.slane %v2549, %v2553
    %v2588 = vunpack.c.l.b16 %v2517
    %v2589 = vunpack.c.l.b16 %v2518
    %v2590 = vunpack.c.l.b16 %v2519
    %v2591 = vunpack.c.l.b16 %v2520
    %v2592 = vunpack.c.l.b16 %v2521
    %v2593 = vunpack.c.l.b16 %v2522
    %v2594 = vunpack.c.l.b16 %v2523
    %v2595 = vunpack.c.l.b16 %v2524
    %v2596 = vunpack.c.l.b16 %v2525
    %v2597 = vunpack.c.l.b16 %v2526
    %v2598 = vunpack.c.l.b16 %v2527
    %v2599 = vunpack.c.l.b16 %v2528
    %v2600 = vunpack.c.l.b16 %v2529
    %v2601 = vunpack.c.l.b16 %v2530
    %v2602 = vunpack.c.l.b16 %v2531
    %v2603 = vunpack.c.l.b16 %v2532
    %v2604 = vunpack.c.l.b16 %v2533
    %v2605 = vunpack.c.l.b16 %v2534
    %v2606 = vunpack.c.l.b16 %v2535
    %v2607 = vunpack.c.l.b16 %v2536
    %v2608 = vunpack.c.l.b16 %v2537
    %v2609 = vunpack.c.l.b16 %v2538
    %v2610 = vunpack.c.l.b16 %v2539
    %v2611 = vunpack.c.l.b16 %v2540
    %v2612 = vunpack.c.l.b16 %v2541
    %v2613 = vunpack.c.l.b16 %v2542
    %v2614 = vunpack.c.l.b16 %v2543
    %v2615 = vunpack.c.l.b16 %v2544
    %v2616 = vunpack.c.l.b16 %v2545
    %v2617 = vunpack.c.l.b16 %v2546
    %v2618 = vunpack.c.l.b16 %v2547
    %v2619 = vunpack.c.l.b16 %v2548
    %v2620 = vpack.c.b16 %v2589, %v2588
    %v2621 = vpack.c.b16 %v2591, %v2590
    %v2622 = vpack.c.b16 %v2593, %v2592
    %v2623 = vpack.c.b16 %v2595, %v2594
    %v2624 = vpack.c.b16 %v2597, %v2596
    %v2625 = vpack.c.b16 %v2599, %v2598
    %v2626 = vpack.c.b16 %v2601, %v2600
    %v2627 = vpack.c.b16 %v2603, %v2602
    %v2628 = vpack.c.b16 %v2605, %v2604
    %v2629 = vpack.c.b16 %v2607, %v2606
    %v2630 = vpack.c.b16 %v2609, %v2608
    %v2631 = vpack.c.b16 %v2611, %v2610
    %v2632 = vpack.c.b16 %v2613, %v2612
    %v2633 = vpack.c.b16 %v2615, %v2614
    %v2634 = vpack.c.b16 %v2617, %v2616
    %v2635 = vpack.c.b16 %v2619, %v2618
    %2652 = vmatprep.subr.bf16.mxu0 0
    %2653 = vmatpush1.bf16.msra.mxu0 %v2620
    %2654 = vmatprep.subr.bf16.mxu0 0
    %2655 = vmatpush1.bf16.msra.mxu0 %v2621
    %2656 = vmatprep.subr.bf16.mxu0 0
    %2657 = vmatpush1.bf16.msra.mxu0 %v2622
    %2658 = vmatprep.subr.bf16.mxu0 0
    %2659 = vmatpush1.bf16.msra.mxu0 %v2623
    %2660 = vmatprep.subr.bf16.mxu0 0
    %2661 = vmatpush1.bf16.msra.mxu0 %v2624
    %2662 = vmatprep.subr.bf16.mxu0 0
    %2663 = vmatpush1.bf16.msra.mxu0 %v2625
    %2664 = vmatprep.subr.bf16.mxu0 0
    %2665 = vmatpush1.bf16.msra.mxu0 %v2626
    %2666 = vmatprep.subr.bf16.mxu0 0
    %2667 = vmatpush1.bf16.msra.mxu0 %v2627
    %2668 = vmatprep.subr.bf16.mxu0 0
    %2669 = vmatpush1.bf16.msra.mxu0 %v2628
    %2670 = vmatprep.subr.bf16.mxu0 0
    %2671 = vmatpush1.bf16.msra.mxu0 %v2629
    %2672 = vmatprep.subr.bf16.mxu0 0
    %2673 = vmatpush1.bf16.msra.mxu0 %v2630
    %2674 = vmatprep.subr.bf16.mxu0 0
    %2675 = vmatpush1.bf16.msra.mxu0 %v2631
    %2676 = vmatprep.subr.bf16.mxu0 0
    %2677 = vmatpush1.bf16.msra.mxu0 %v2632
    %2678 = vmatprep.subr.bf16.mxu0 0
    %2679 = vmatpush1.bf16.msra.mxu0 %v2633
    %2680 = vmatprep.subr.bf16.mxu0 0
    %2681 = vmatpush1.bf16.msra.mxu0 %v2634
    %2682 = vmatprep.subr.bf16.mxu0 0
    %2683 = vmatpush1.bf16.msra.mxu0 %v2635
    %2684 = vmatprep.mubr.bf16.mxu0 %v2516
    %2685 = vmatmul.mubr.bf16.gmra.mrb[0].mxu0 %v2515
    %v2686 = vpop.f32.mrb[0].mxu0
    %v2687 = vadd.f32 %v2554, %v2686
    %v2688 = vpop.f32.mrb[0].mxu0
    %v2689 = vpop.f32.mrb[0].mxu0
    %v2690 = vpop.f32.mrb[0].mxu0
    %2691 = vdwg.mxu0
    %v2692 = vmax.f32 %v2687, 0.0
    %v2693 = vpack.c.bf16 %v2692, %v2692
    %v2694 = vld [vmem:[#allocation6] sm:$0xf]
    %v2695 = vld [vmem:[#allocation6 + $0x4] sm:$0xf]
    %v2696 = vld [vmem:[#allocation6 + $0x8] sm:$0xf]
    %v2697 = vld [vmem:[#allocation6 + $0xc] sm:$0xf]
    %v2698 = vld [vmem:[#allocation6 + $0x10] sm:$0xf]
    %v2699 = vld [vmem:[#allocation6 + $0x14] sm:$0xf]
    %v2700 = vld [vmem:[#allocation6 + $0x18] sm:$0xf]
    %v2701 = vld [vmem:[#allocation6 + $0x1c] sm:$0xf]
    %v2702 = vld [vmem:[#allocation6 + $0x20] sm:$0xf]
    %v2703 = vld [vmem:[#allocation6 + $0x24] sm:$0xf]
    %v2704 = vld [vmem:[#allocation6 + $0x28] sm:$0xf]
    %v2705 = vld [vmem:[#allocation6 + $0x2c] sm:$0xf]
    %v2706 = vld [vmem:[#allocation6 + $0x30] sm:$0xf]
    %v2707 = vld [vmem:[#allocation6 + $0x34] sm:$0xf]
    %v2708 = vld [vmem:[#allocation6 + $0x38] sm:$0xf]
    %v2709 = vld [vmem:[#allocation6 + $0x3c] sm:$0xf]
    %v2710 = vld [vmem:[%s6 + $0x7] sm:$0x1]
    %v2712 = vlaneseq
    %v2713 = vshrl.u32 %v2712, 7
    %v2714 = vsub.s32 0, %v2713
    %v2715 = vrot.slane %v2710, %v2714
    %v2733 = vunpack.c.l.b16 %v2694
    %v2734 = vunpack.c.l.b16 %v2695
    %v2735 = vunpack.c.l.b16 %v2696
    %v2736 = vunpack.c.l.b16 %v2697
    %v2737 = vunpack.c.l.b16 %v2698
    %v2738 = vunpack.c.l.b16 %v2699
    %v2739 = vunpack.c.l.b16 %v2700
    %v2740 = vunpack.c.l.b16 %v2701
    %v2741 = vunpack.c.l.b16 %v2702
    %v2742 = vunpack.c.l.b16 %v2703
    %v2743 = vunpack.c.l.b16 %v2704
    %v2744 = vunpack.c.l.b16 %v2705
    %v2745 = vunpack.c.l.b16 %v2706
    %v2746 = vunpack.c.l.b16 %v2707
    %v2747 = vunpack.c.l.b16 %v2708
    %v2748 = vunpack.c.l.b16 %v2709
    %v2749 = vpack.c.b16 %v2734, %v2733
    %v2750 = vpack.c.b16 %v2736, %v2735
    %v2751 = vpack.c.b16 %v2738, %v2737
    %v2752 = vpack.c.b16 %v2740, %v2739
    %v2753 = vpack.c.b16 %v2742, %v2741
    %v2754 = vpack.c.b16 %v2744, %v2743
    %v2755 = vpack.c.b16 %v2746, %v2745
    %v2756 = vpack.c.b16 %v2748, %v2747
    %2765 = vmatprep.subr.bf16.mxu0 0
    %2766 = vmatpush1.bf16.msra.mxu0 %v2749
    %2767 = vmatprep.subr.bf16.mxu0 0
    %2768 = vmatpush1.bf16.msra.mxu0 %v2750
    %2769 = vmatprep.subr.bf16.mxu0 0
    %2770 = vmatpush1.bf16.msra.mxu0 %v2751
    %2771 = vmatprep.subr.bf16.mxu0 0
    %2772 = vmatpush1.bf16.msra.mxu0 %v2752
    %2773 = vmatprep.subr.bf16.mxu0 0
    %2774 = vmatpush1.bf16.msra.mxu0 %v2753
    %2775 = vmatprep.subr.bf16.mxu0 0
    %2776 = vmatpush1.bf16.msra.mxu0 %v2754
    %2777 = vmatprep.subr.bf16.mxu0 0
    %2778 = vmatpush1.bf16.msra.mxu0 %v2755
    %2779 = vmatprep.subr.bf16.mxu0 0
    %2780 = vmatpush1.bf16.msra.mxu0 %v2756
    %2781 = vmatprep.subr.bf16.mxu0 0
    %2782 = vmatpush1.bf16.msra.mxu0 0
    %2783 = vmatprep.subr.bf16.mxu0 0
    %2784 = vmatpush1.bf16.msra.mxu0 0
    %2785 = vmatprep.subr.bf16.mxu0 0
    %2786 = vmatpush1.bf16.msra.mxu0 0
    %2787 = vmatprep.subr.bf16.mxu0 0
    %2788 = vmatpush1.bf16.msra.mxu0 0
    %2789 = vmatprep.subr.bf16.mxu0 0
    %2790 = vmatpush1.bf16.msra.mxu0 0
    %2791 = vmatprep.subr.bf16.mxu0 0
    %2792 = vmatpush1.bf16.msra.mxu0 0
    %2793 = vmatprep.subr.bf16.mxu0 0
    %2794 = vmatpush1.bf16.msra.mxu0 0
    %2795 = vmatprep.subr.bf16.mxu0 0
    %2796 = vmatpush1.bf16.msra.mxu0 0
    %2797 = vmatprep.mubr.bf16.mxu0 0
    %2798 = vmatmul.mubr.bf16.gmra.mrb[0].mxu0 %v2693
    %v2799 = vpop.f32.mrb[0].mxu0
    %v2800 = vadd.f32 %v2715, %v2799
    %v2801 = vpop.f32.mrb[0].mxu0
    %v2802 = vpop.f32.mrb[0].mxu0
    %v2803 = vpop.f32.mrb[0].mxu0
    %2804 = vdwg.mxu0
    %v2805 = vmax.f32 %v2800, 0.0
    %v2806 = vpack.c.bf16 %v2805, %v2805
    %v2807 = vld [vmem:[#allocation7] sm:$0xf]
    %v2808 = vld [vmem:[#allocation7 + $0x4] sm:$0xf]
    %v2809 = vld [vmem:[#allocation7 + $0x8] sm:$0xf]
    %v2810 = vld [vmem:[#allocation7 + $0xc] sm:$0xf]
    %v2811 = vld [vmem:[#allocation7 + $0x10] sm:$0xf]
    %v2812 = vld [vmem:[#allocation7 + $0x14] sm:$0xf]
    %v2813 = vld [vmem:[#allocation7 + $0x18] sm:$0xf]
    %v2814 = vld [vmem:[#allocation7 + $0x1c] sm:$0xf]
    %v2815 = vld [vmem:[#allocation7 + $0x20] sm:$0xf]
    %v2816 = vld [vmem:[#allocation7 + $0x24] sm:$0xf]
    %v2817 = vld [vmem:[#allocation7 + $0x28] sm:$0xf]
    %v2818 = vld [vmem:[#allocation7 + $0x2c] sm:$0xf]
    %v2819 = vld [vmem:[#allocation7 + $0x30] sm:$0xf]
    %v2820 = vld [vmem:[#allocation7 + $0x34] sm:$0xf]
    %v2821 = vld [vmem:[#allocation7 + $0x38] sm:$0xf]
    %v2822 = vld [vmem:[#allocation7 + $0x3c] sm:$0xf]
    %v2823 = vld [vmem:[%s6 + $0x8] sm:$0x1]
    %v2825 = vlaneseq
    %v2826 = vshrl.u32 %v2825, 7
    %v2827 = vsub.s32 0, %v2826
    %v2828 = vrot.slane %v2823, %v2827
    %v2846 = vunpack.c.l.b16 %v2807
    %v2847 = vunpack.c.l.b16 %v2808
    %v2848 = vunpack.c.l.b16 %v2809
    %v2849 = vunpack.c.l.b16 %v2810
    %v2850 = vunpack.c.l.b16 %v2811
    %v2851 = vunpack.c.l.b16 %v2812
    %v2852 = vunpack.c.l.b16 %v2813
    %v2853 = vunpack.c.l.b16 %v2814
    %v2854 = vunpack.c.l.b16 %v2815
    %v2855 = vunpack.c.l.b16 %v2816
    %v2856 = vunpack.c.l.b16 %v2817
    %v2857 = vunpack.c.l.b16 %v2818
    %v2858 = vunpack.c.l.b16 %v2819
    %v2859 = vunpack.c.l.b16 %v2820
    %v2860 = vunpack.c.l.b16 %v2821
    %v2861 = vunpack.c.l.b16 %v2822
    %v2862 = vpack.c.b16 %v2847, %v2846
    %v2863 = vpack.c.b16 %v2849, %v2848
    %v2864 = vpack.c.b16 %v2851, %v2850
    %v2865 = vpack.c.b16 %v2853, %v2852
    %v2866 = vpack.c.b16 %v2855, %v2854
    %v2867 = vpack.c.b16 %v2857, %v2856
    %v2868 = vpack.c.b16 %v2859, %v2858
    %v2869 = vpack.c.b16 %v2861, %v2860
    %2878 = vmatprep.subr.bf16.mxu0 0
    %2879 = vmatpush1.bf16.msra.mxu0 %v2862
    %2880 = vmatprep.subr.bf16.mxu0 0
    %2881 = vmatpush1.bf16.msra.mxu0 %v2863
    %2882 = vmatprep.subr.bf16.mxu0 0
    %2883 = vmatpush1.bf16.msra.mxu0 %v2864
    %2884 = vmatprep.subr.bf16.mxu0 0
    %2885 = vmatpush1.bf16.msra.mxu0 %v2865
    %2886 = vmatprep.subr.bf16.mxu0 0
    %2887 = vmatpush1.bf16.msra.mxu0 %v2866
    %2888 = vmatprep.subr.bf16.mxu0 0
    %2889 = vmatpush1.bf16.msra.mxu0 %v2867
    %2890 = vmatprep.subr.bf16.mxu0 0
    %2891 = vmatpush1.bf16.msra.mxu0 %v2868
    %2892 = vmatprep.subr.bf16.mxu0 0
    %2893 = vmatpush1.bf16.msra.mxu0 %v2869
    %2894 = vmatprep.subr.bf16.mxu0 0
    %2895 = vmatpush1.bf16.msra.mxu0 0
    %2896 = vmatprep.subr.bf16.mxu0 0
    %2897 = vmatpush1.bf16.msra.mxu0 0
    %2898 = vmatprep.subr.bf16.mxu0 0
    %2899 = vmatpush1.bf16.msra.mxu0 0
    %2900 = vmatprep.subr.bf16.mxu0 0
    %2901 = vmatpush1.bf16.msra.mxu0 0
    %2902 = vmatprep.subr.bf16.mxu0 0
    %2903 = vmatpush1.bf16.msra.mxu0 0
    %2904 = vmatprep.subr.bf16.mxu0 0
    %2905 = vmatpush1.bf16.msra.mxu0 0
    %2906 = vmatprep.subr.bf16.mxu0 0
    %2907 = vmatpush1.bf16.msra.mxu0 0
    %2908 = vmatprep.subr.bf16.mxu0 0
    %2909 = vmatpush1.bf16.msra.mxu0 0
    %2910 = vmatprep.mubr.bf16.mxu0 0
    %2911 = vmatmul.mubr.bf16.gmra.mrb[0].mxu0 %v2806
    %v2912 = vpop.f32.mrb[0].mxu0
    %v2913 = vadd.f32 %v2828, %v2912
    %v2914 = vpop.f32.mrb[0].mxu0
    %v2915 = vpop.f32.mrb[0].mxu0
    %v2916 = vpop.f32.mrb[0].mxu0
    %2917 = vdwg.mxu0
    %2918 = vst [vmem:[%s7] sm:$0x3] %v2913
    // Predicated region
    $region46: #{encoder_forward.1} parent=1 // pred_check
      _
    $region47: #{encoder_forward.1} parent=1 // pred_check_branch
      %2920 = sbr.rel (0) target = $region49
    $region48: #{encoder_forward.1} parent=1 // pred_region
      _
    $region49: #{encoder_forward.1} parent=1 // pred_fallthru
      _
    // Predicated region
    $region50: #{encoder_forward.1} parent=1 // pred_check
      _
    $region51: #{encoder_forward.1} parent=1 // pred_check_branch
      %2922 = sbr.rel (0) target = $region53
    $region52: #{encoder_forward.1} parent=1 // pred_region
      _
    $region53: #{encoder_forward.1} parent=1 // pred_fallthru
      _
    %2923 = vsyncpa [#allocation3], 1
    %2924 = vsyncpa [#allocation5], 1
    %2925 = vsyncpa [#allocation8], 1

</llo_original>
